<compile_context>
chip_gen: v7x
topology: tpu7x:2x2x1
jax: 0.10.0
libtpu: 0.0.40
codegen_flags: <defaults>
</compile_context>

<pallas_src>
import math
from functools import partial

import jax
import jax.numpy as jnp
from jax import lax
from jax.experimental import pallas as pl
from jax.experimental.pallas import tpu as pltpu


def _mha_kernel(x_ref, wqkv_ref, woT_ref, bqkv_ref, bo_ref, kpm_ref, *rest,
                num_heads, head_dim, has_attn_mask):
    """Fused multi-head self-attention for one batch element.

    x_ref    : (1, T, E)   bf16 input features for this batch element
    wqkv_ref : (E, 3E)     bf16 fused [Wq^T * scale | Wk^T | Wv^T]
    woT_ref  : (E, E)      bf16 pre-transposed output-projection weight
    bqkv_ref : (1, 3E)     f32 fused [bq * scale | bk | bv]
    bo_ref   : (1, E)      f32 output-projection bias
    kpm_ref  : (1, 1, T)   f32 additive key-padding row (0 / -1e9)
    attn_ref : (T, T)      f32 additive attention mask (only if has_attn_mask)
    o_ref    : (1, T, E)   output
    """
    if has_attn_mask:
        attn_ref, o_ref = rest
    else:
        attn_ref = None
        (o_ref,) = rest

    H, D = num_heads, head_dim
    E = H * D
    x = x_ref[0]                       # (T, E) bf16
    T = x.shape[0]

    # One fused (T,E)@(E,3E) MXU matmul (scaling already folded into Q cols).
    qkv = jnp.dot(x, wqkv_ref[...], preferred_element_type=jnp.float32)
    qkv = (qkv + bqkv_ref[...]).astype(jnp.bfloat16)          # (T, 3E)

    kpm = kpm_ref[0]                   # (1, T) additive over keys
    amask = attn_ref[...] if has_attn_mask else None          # (T, T)
    woT = woT_ref[...]                 # (E, E) bf16, VMEM-resident

    out = jnp.zeros((T, E), jnp.float32)
    for h in range(H):                 # unrolled at trace time (H static, small)
        q_h = qkv[:, h * D:(h + 1) * D]                       # (T, D) lane slices
        k_h = qkv[:, E + h * D:E + (h + 1) * D]
        v_h = qkv[:, 2 * E + h * D:2 * E + (h + 1) * D]

        # scores: contract over D directly (no explicit k transpose).
        s = lax.dot_general(q_h, k_h, (((1,), (1,)), ((), ())),
                            preferred_element_type=jnp.float32)  # (T, T)
        s = s + kpm
        if has_attn_mask:
            s = s + amask

        # numerically-stable softmax in f32; reciprocal on the EUP (approx).
        s = s - jnp.max(s, axis=-1, keepdims=True)
        e = jnp.exp(s)
        p = e * pl.reciprocal(jnp.sum(e, axis=-1, keepdims=True), approx=True)

        ctx = jnp.dot(p.astype(jnp.bfloat16), v_h,
                      preferred_element_type=jnp.float32)        # (T, D)
        # accumulate this head's contribution to the output projection.
        out = out + jnp.dot(ctx.astype(jnp.bfloat16),
                            woT[h * D:(h + 1) * D, :],
                            preferred_element_type=jnp.float32)  # (T, E)

    out = out + bo_ref[...]
    o_ref[0] = out.astype(o_ref.dtype)


def mha_grid_forward_btE(x_bte, grid_img_mask, attn_mask, params, num_heads):
    """Core fused MHA on (B, T, E) layout (lane-dense last dim).

    x_bte        : (B, T, E)  features
    grid_img_mask: (B, T)     1/True where key positions are padded
    attn_mask    : (T, T)     nonzero where attention is excluded, or None
    params       : (wq, bq, wk, bk, wv, bv, wo, bo)   (PyTorch out x in layout)
    returns      : (B, T, E)
    """
    B, T, E = x_bte.shape
    assert E % num_heads == 0
    head_dim = E // num_heads
    scaling = float(head_dim) ** -0.5

    wq, bq, wk, bk, wv, bv, wo, bo = params
    # PyTorch Linear computes x @ W.T + b.  Pre-transpose, fuse Q/K/V into one
    # (E,3E) operand and fold the 1/sqrt(D) scaling into the Q weight + bias.
    wqkv = jnp.concatenate([wq.T * scaling, wk.T, wv.T], axis=1).astype(jnp.bfloat16)
    bqkv = jnp.concatenate([bq * scaling, bk, bv]).reshape(1, 3 * E).astype(jnp.float32)
    woT = wo.T.astype(jnp.bfloat16)
    bo2 = bo.reshape(1, E).astype(jnp.float32)

    x = x_bte.astype(jnp.bfloat16)

    # Additive key-padding rows, O(B*T) (never a (B,T,T) mask).  -1e9 instead
    # of -inf so a fully-padded row yields uniform attention instead of NaN.
    kpm = jnp.where(grid_img_mask.astype(bool), -1e9, 0.0)
    kpm = kpm.reshape(B, 1, T).astype(jnp.float32)

    has_attn_mask = attn_mask is not None
    operands = [x, wqkv, woT, bqkv, bo2, kpm]
    in_specs = [
        pl.BlockSpec((1, T, E), lambda b: (b, 0, 0)),       # x slab per batch
        pl.BlockSpec((E, 3 * E), lambda b: (0, 0)),         # fused QKV weight (resident)
        pl.BlockSpec((E, E), lambda b: (0, 0)),             # out-proj weight (resident)
        pl.BlockSpec((1, 3 * E), lambda b: (0, 0)),         # fused QKV bias
        pl.BlockSpec((1, E), lambda b: (0, 0)),             # out-proj bias
        pl.BlockSpec((1, 1, T), lambda b: (b, 0, 0)),       # key-padding row
    ]
    if has_attn_mask:
        # attn_mask.masked_fill(attn_mask.bool(), -1e8) semantics, computed
        # once; (T,T) stays VMEM-resident across batch steps.
        am = attn_mask.astype(jnp.float32)
        am = jnp.where(am != 0.0, -1e8, am)
        operands.append(am)
        in_specs.append(pl.BlockSpec((T, T), lambda b: (0, 0)))

    kernel = partial(_mha_kernel, num_heads=num_heads, head_dim=head_dim,
                     has_attn_mask=has_attn_mask)

    return pl.pallas_call(
        kernel,
        out_shape=jax.ShapeDtypeStruct((B, T, E), x_bte.dtype),
        grid=(B,),
        in_specs=in_specs,
        out_specs=pl.BlockSpec((1, T, E), lambda b: (b, 0, 0)),
        compiler_params=pltpu.CompilerParams(
            dimension_semantics=("parallel",)),
    )(*operands)


def transformer_encoder_layer_grid_forward(x_tbe, grid_img_mask, attn_mask,
                                           params, num_heads):
    """Matches TransformerEncoderLayer_grid.forward (eval mode).

    PyTorch layout is (T, B, E).  Callers that already hold (B, T, E) data
    should call mha_grid_forward_btE directly and skip these two transposes
    (each is a full extra HBM read+write pass outside the kernel).
    """
    x_bte = jnp.transpose(x_tbe, (1, 0, 2))
    out_bte = mha_grid_forward_btE(x_bte, grid_img_mask, attn_mask, params,
                                   num_heads)
    return jnp.transpose(out_bte, (1, 0, 2))


# ------------------------- pure-JAX reference ------------------------------

def _reference_forward(x_tbe, grid_img_mask, attn_mask, params, num_heads):
    T, B, E = x_tbe.shape
    D = E // num_heads
    scaling = float(D) ** -0.5
    wq, bq, wk, bk, wv, bv, wo, bo = params
    x = jnp.transpose(x_tbe, (1, 0, 2))                        # (B, T, E)
    q = (x @ wq.T + bq) * scaling
    k = x @ wk.T + bk
    v = x @ wv.T + bv
    q = q.reshape(B, T, num_heads, D).transpose(0, 2, 1, 3)    # (B,H,T,D)
    k = k.reshape(B, T, num_heads, D).transpose(0, 2, 1, 3)
    v = v.reshape(B, T, num_heads, D).transpose(0, 2, 1, 3)
    s = jnp.einsum('bhqd,bhkd->bhqk', q, k)
    s = s + jnp.where(grid_img_mask.astype(bool), -1e9, 0.0)[:, None, None, :]
    if attn_mask is not None:
        am = jnp.where(attn_mask != 0.0, -1e8, attn_mask.astype(jnp.float32))
        s = s + am[None, None]
    p = jax.nn.softmax(s, axis=-1)
    ctx = jnp.einsum('bhqk,bhkd->bhqd', p, v)
    ctx = ctx.transpose(0, 2, 1, 3).reshape(B, T, E)
    out = ctx @ wo.T + bo
    return jnp.transpose(out, (1, 0, 2))                       # (T, B, E)


def _xavier_uniform(key, shape, gain=1.0):
    fan_out, fan_in = shape
    bound = gain * math.sqrt(6.0 / (fan_in + fan_out))
    return jax.random.uniform(key, shape, jnp.float32, -bound, bound)


def make_params(key, embed_dim):
    """Deterministic params matching fairseq MultiheadAttention init shapes."""
    ks = jax.random.split(key, 8)
    g = 1.0 / math.sqrt(2.0)                     # qkv_same_dim gain in fairseq
    wq = _xavier_uniform(ks[0], (embed_dim, embed_dim), g)
    wk = _xavier_uniform(ks[1], (embed_dim, embed_dim), g)
    wv = _xavier_uniform(ks[2], (embed_dim, embed_dim), g)
    wo = _xavier_uniform(ks[3], (embed_dim, embed_dim), 1.0)
    bq = 0.02 * jax.random.normal(ks[4], (embed_dim,), jnp.float32)
    bk = 0.02 * jax.random.normal(ks[5], (embed_dim,), jnp.float32)
    bv = 0.02 * jax.random.normal(ks[6], (embed_dim,), jnp.float32)
    bo = jnp.zeros((embed_dim,), jnp.float32)    # out_proj bias = 0 in fairseq
    return (wq, bq, wk, bk, wv, bv, wo, bo)


# NOTE: Norm_Layer (fc1/fc2/layernorm) is constructed in the PyTorch __init__
# but never invoked by TransformerEncoderLayer_grid.forward, so it is
# intentionally not part of the kernel; dropout layers are no-ops in eval.

if __name__ == "__main__":
    # Small but lane-dense shapes: E multiple of 128 (head_dim = 128).
    T, B, E, H = 16, 2, 256, 2                   # seq, batch, embed_dim, heads
    key = jax.random.PRNGKey(0)
    kx, kmask, kparams = jax.random.split(key, 3)

    grid_img_features = jax.random.normal(kx, (T, B, E), jnp.float32)
    # key padding mask: (B, T), 1 == padded key position
    grid_img_mask = (jax.random.uniform(kmask, (B, T)) > 0.8).astype(jnp.float32)
    grid_img_mask = grid_img_mask.at[:, 0].set(0.0)   # keep >=1 valid key

    params = make_params(kparams, E)

    # 1) attn_mask=None path
    out0 = transformer_encoder_layer_grid_forward(
        grid_img_features, grid_img_mask, None, params, H)
    out0 = jax.block_until_ready(out0)
    ref0 = _reference_forward(grid_img_features, grid_img_mask, None, params, H)
    err0 = float(jnp.max(jnp.abs(out0 - ref0)))

    # 2) explicit attn_mask path (mask out strictly-upper triangle)
    attn_mask = jnp.triu(jnp.ones((T, T), jnp.float32), k=1)
    out1 = transformer_encoder_layer_grid_forward(
        grid_img_features, grid_img_mask, attn_mask, params, H)
    out1 = jax.block_until_ready(out1)
    ref1 = _reference_forward(grid_img_features, grid_img_mask, attn_mask,
                              params, H)
    err1 = float(jnp.max(jnp.abs(out1 - ref1)))

    assert out0.shape == (T, B, E) and out1.shape == (T, B, E)
    assert bool(jnp.all(jnp.isfinite(out0))) and bool(jnp.all(jnp.isfinite(out1)))
    # bf16 MXU operands + approx reciprocal vs f32 reference: loose tolerance.
    assert err0 < 0.05 and err1 < 0.05, (err0, err1)
    print("KERNEL_OK")
</pallas_src>

<mosaic_0001>
module attributes {stable_mosaic.version = 11 : i64} {
  func.func @_mha_kernel(%arg0: i32, %arg1: memref<1x16x256xbf16, #tpu.memory_space<vmem>>, %arg2: memref<256x768xbf16, #tpu.memory_space<vmem>>, %arg3: memref<256x256xbf16, #tpu.memory_space<vmem>>, %arg4: memref<1x768xf32, #tpu.memory_space<vmem>>, %arg5: memref<1x256xf32, #tpu.memory_space<vmem>>, %arg6: memref<1x1x16xf32, #tpu.memory_space<vmem>>, %arg7: memref<1x16x256xf32, #tpu.memory_space<vmem>>) attributes {dimension_semantics = [#tpu.dimension_semantics<parallel>], iteration_bounds = array<i64: 2>, scalar_prefetch = 0 : i64, scratch_operands = 0 : i64, tpu.core_type = #tpu.core_type<tc>, window_params = [{transform_indices = @transform_0, window_bounds = array<i64: 1, 16, 256>}, {pipeline_mode = #tpu.pipeline_mode<synchronous>, transform_indices = @transform_1, window_bounds = array<i64: 256, 768>}, {pipeline_mode = #tpu.pipeline_mode<synchronous>, transform_indices = @transform_2, window_bounds = array<i64: 256, 256>}, {pipeline_mode = #tpu.pipeline_mode<synchronous>, transform_indices = @transform_3, window_bounds = array<i64: 1, 768>}, {pipeline_mode = #tpu.pipeline_mode<synchronous>, transform_indices = @transform_4, window_bounds = array<i64: 1, 256>}, {transform_indices = @transform_5, window_bounds = array<i64: 1, 1, 16>}, {transform_indices = @transform_6, window_bounds = array<i64: 1, 16, 256>}]} {
    %c0 = arith.constant 0 : index
    %c0_0 = arith.constant 0 : index
    %c0_1 = arith.constant 0 : index
    %0 = vector.load %arg1[%c0, %c0_0, %c0_1] : memref<1x16x256xbf16, #tpu.memory_space<vmem>>, vector<1x16x256xbf16>
    %1 = vector.shape_cast %0 : vector<1x16x256xbf16> to vector<16x256xbf16>
    %c0_2 = arith.constant 0 : index
    %c0_3 = arith.constant 0 : index
    %2 = vector.load %arg2[%c0_2, %c0_3] : memref<256x768xbf16, #tpu.memory_space<vmem>>, vector<256x768xbf16>
    %cst = arith.constant dense<0.000000e+00> : vector<16x768xf32>
    %3 = tpu.matmul %1, %2, %cst {dimension_numbers = #tpu.dot_dimension_numbers<[1], [0], [0], [1], [0, 0, 1, 1], [], []>} : vector<16x256xbf16>, vector<256x768xbf16>, vector<16x768xf32> -> vector<16x768xf32>
    %c0_4 = arith.constant 0 : index
    %c0_5 = arith.constant 0 : index
    %4 = vector.load %arg4[%c0_4, %c0_5] : memref<1x768xf32, #tpu.memory_space<vmem>>, vector<1x768xf32>
    %5 = vector.broadcast %4 : vector<1x768xf32> to vector<16x768xf32>
    %6 = arith.addf %3, %5 : vector<16x768xf32>
    %7 = arith.truncf %6 : vector<16x768xf32> to vector<16x768xbf16>
    %c0_6 = arith.constant 0 : index
    %c0_7 = arith.constant 0 : index
    %c0_8 = arith.constant 0 : index
    %8 = vector.load %arg6[%c0_6, %c0_7, %c0_8] : memref<1x1x16xf32, #tpu.memory_space<vmem>>, vector<1x1x16xf32>
    %9 = vector.shape_cast %8 : vector<1x1x16xf32> to vector<1x16xf32>
    %c0_9 = arith.constant 0 : index
    %c0_10 = arith.constant 0 : index
    %10 = vector.load %arg3[%c0_9, %c0_10] : memref<256x256xbf16, #tpu.memory_space<vmem>>, vector<256x256xbf16>
    %cst_11 = arith.constant 0.000000e+00 : f32
    %11 = vector.broadcast %cst_11 : f32 to vector<16x256xf32>
    %12 = vector.extract_strided_slice %7 {offsets = [0, 0], sizes = [16, 128], strides = [1, 1]} : vector<16x768xbf16> to vector<16x128xbf16>
    %13 = vector.extract_strided_slice %7 {offsets = [0, 256], sizes = [16, 128], strides = [1, 1]} : vector<16x768xbf16> to vector<16x128xbf16>
    %14 = vector.extract_strided_slice %7 {offsets = [0, 512], sizes = [16, 128], strides = [1, 1]} : vector<16x768xbf16> to vector<16x128xbf16>
    %cst_12 = arith.constant dense<0.000000e+00> : vector<16x16xf32>
    %15 = tpu.matmul %12, %13, %cst_12 {dimension_numbers = #tpu.dot_dimension_numbers<[1], [1], [0], [0], [0, 0, 1, 0], [], []>} : vector<16x128xbf16>, vector<16x128xbf16>, vector<16x16xf32> -> vector<16x16xf32>
    %16 = vector.broadcast %9 : vector<1x16xf32> to vector<16x16xf32>
    %17 = arith.addf %15, %16 : vector<16x16xf32>
    %cst_13 = arith.constant dense<0xFF800000> : vector<16xf32>
    %18 = vector.multi_reduction <maximumf>, %17, %cst_13 [1] : vector<16x16xf32> to vector<16xf32>
    %19 = vector.shape_cast %18 : vector<16xf32> to vector<16x1xf32>
    %20 = vector.broadcast %19 : vector<16x1xf32> to vector<16x16xf32>
    %21 = arith.subf %17, %20 : vector<16x16xf32>
    %22 = math.exp %21 : vector<16x16xf32>
    %cst_14 = arith.constant dense<0.000000e+00> : vector<16xf32>
    %23 = vector.multi_reduction <add>, %22, %cst_14 [1] : vector<16x16xf32> to vector<16xf32>
    %24 = vector.shape_cast %23 : vector<16xf32> to vector<16x1xf32>
    %25 = tpu.reciprocal %24 {approx = true} : vector<16x1xf32> -> vector<16x1xf32>
    %26 = vector.broadcast %25 : vector<16x1xf32> to vector<16x16xf32>
    %27 = arith.mulf %22, %26 : vector<16x16xf32>
    %28 = arith.truncf %27 : vector<16x16xf32> to vector<16x16xbf16>
    %cst_15 = arith.constant dense<0.000000e+00> : vector<16x128xf32>
    %29 = tpu.matmul %28, %14, %cst_15 {dimension_numbers = #tpu.dot_dimension_numbers<[1], [0], [0], [1], [0, 0, 1, 1], [], []>} : vector<16x16xbf16>, vector<16x128xbf16>, vector<16x128xf32> -> vector<16x128xf32>
    %30 = arith.truncf %29 : vector<16x128xf32> to vector<16x128xbf16>
    %31 = vector.extract_strided_slice %10 {offsets = [0, 0], sizes = [128, 256], strides = [1, 1]} : vector<256x256xbf16> to vector<128x256xbf16>
    %cst_16 = arith.constant dense<0.000000e+00> : vector<16x256xf32>
    %32 = tpu.matmul %30, %31, %cst_16 {dimension_numbers = #tpu.dot_dimension_numbers<[1], [0], [0], [1], [0, 0, 1, 1], [], []>} : vector<16x128xbf16>, vector<128x256xbf16>, vector<16x256xf32> -> vector<16x256xf32>
    %33 = arith.addf %11, %32 : vector<16x256xf32>
    %34 = vector.extract_strided_slice %7 {offsets = [0, 128], sizes = [16, 128], strides = [1, 1]} : vector<16x768xbf16> to vector<16x128xbf16>
    %35 = vector.extract_strided_slice %7 {offsets = [0, 384], sizes = [16, 128], strides = [1, 1]} : vector<16x768xbf16> to vector<16x128xbf16>
    %36 = vector.extract_strided_slice %7 {offsets = [0, 640], sizes = [16, 128], strides = [1, 1]} : vector<16x768xbf16> to vector<16x128xbf16>
    %cst_17 = arith.constant dense<0.000000e+00> : vector<16x16xf32>
    %37 = tpu.matmul %34, %35, %cst_17 {dimension_numbers = #tpu.dot_dimension_numbers<[1], [1], [0], [0], [0, 0, 1, 0], [], []>} : vector<16x128xbf16>, vector<16x128xbf16>, vector<16x16xf32> -> vector<16x16xf32>
    %38 = vector.broadcast %9 : vector<1x16xf32> to vector<16x16xf32>
    %39 = arith.addf %37, %38 : vector<16x16xf32>
    %cst_18 = arith.constant dense<0xFF800000> : vector<16xf32>
    %40 = vector.multi_reduction <maximumf>, %39, %cst_18 [1] : vector<16x16xf32> to vector<16xf32>
    %41 = vector.shape_cast %40 : vector<16xf32> to vector<16x1xf32>
    %42 = vector.broadcast %41 : vector<16x1xf32> to vector<16x16xf32>
    %43 = arith.subf %39, %42 : vector<16x16xf32>
    %44 = math.exp %43 : vector<16x16xf32>
    %cst_19 = arith.constant dense<0.000000e+00> : vector<16xf32>
    %45 = vector.multi_reduction <add>, %44, %cst_19 [1] : vector<16x16xf32> to vector<16xf32>
    %46 = vector.shape_cast %45 : vector<16xf32> to vector<16x1xf32>
    %47 = tpu.reciprocal %46 {approx = true} : vector<16x1xf32> -> vector<16x1xf32>
    %48 = vector.broadcast %47 : vector<16x1xf32> to vector<16x16xf32>
    %49 = arith.mulf %44, %48 : vector<16x16xf32>
    %50 = arith.truncf %49 : vector<16x16xf32> to vector<16x16xbf16>
    %cst_20 = arith.constant dense<0.000000e+00> : vector<16x128xf32>
    %51 = tpu.matmul %50, %36, %cst_20 {dimension_numbers = #tpu.dot_dimension_numbers<[1], [0], [0], [1], [0, 0, 1, 1], [], []>} : vector<16x16xbf16>, vector<16x128xbf16>, vector<16x128xf32> -> vector<16x128xf32>
    %52 = arith.truncf %51 : vector<16x128xf32> to vector<16x128xbf16>
    %53 = vector.extract_strided_slice %10 {offsets = [128, 0], sizes = [128, 256], strides = [1, 1]} : vector<256x256xbf16> to vector<128x256xbf16>
    %cst_21 = arith.constant dense<0.000000e+00> : vector<16x256xf32>
    %54 = tpu.matmul %52, %53, %cst_21 {dimension_numbers = #tpu.dot_dimension_numbers<[1], [0], [0], [1], [0, 0, 1, 1], [], []>} : vector<16x128xbf16>, vector<128x256xbf16>, vector<16x256xf32> -> vector<16x256xf32>
    %55 = arith.addf %33, %54 : vector<16x256xf32>
    %c0_22 = arith.constant 0 : index
    %c0_23 = arith.constant 0 : index
    %56 = vector.load %arg5[%c0_22, %c0_23] : memref<1x256xf32, #tpu.memory_space<vmem>>, vector<1x256xf32>
    %57 = vector.broadcast %56 : vector<1x256xf32> to vector<16x256xf32>
    %58 = arith.addf %55, %57 : vector<16x256xf32>
    %c0_24 = arith.constant 0 : index
    %c0_25 = arith.constant 0 : index
    %c0_26 = arith.constant 0 : index
    %59 = vector.load %arg7[%c0_24, %c0_25, %c0_26] : memref<1x16x256xf32, #tpu.memory_space<vmem>>, vector<1x16x256xf32>
    %60 = vector.shape_cast %59 : vector<1x16x256xf32> to vector<16x256xf32>
    %61 = vector.shape_cast %58 : vector<16x256xf32> to vector<1x16x256xf32>
    tpu.vector_store %arg7[%c0_24, %c0_25, %c0_26], %61 {strides = array<i32>} : memref<1x16x256xf32, #tpu.memory_space<vmem>>, vector<1x16x256xf32>,
    return
  }
  func.func @transform_0(%arg0: i32) -> (i32, i32, i32) {
    %c0_i32 = arith.constant 0 : i32
    %c0_i32_0 = arith.constant 0 : i32
    %c0_i32_1 = arith.constant 0 : i32
    return %arg0, %c0_i32, %c0_i32_0 : i32, i32, i32
  }
  func.func @transform_1(%arg0: i32) -> (i32, i32) {
    %c0_i32 = arith.constant 0 : i32
    %c0_i32_0 = arith.constant 0 : i32
    %c0_i32_1 = arith.constant 0 : i32
    return %c0_i32, %c0_i32_0 : i32, i32
  }
  func.func @transform_2(%arg0: i32) -> (i32, i32) {
    %c0_i32 = arith.constant 0 : i32
    %c0_i32_0 = arith.constant 0 : i32
    %c0_i32_1 = arith.constant 0 : i32
    return %c0_i32, %c0_i32_0 : i32, i32
  }
  func.func @transform_3(%arg0: i32) -> (i32, i32) {
    %c0_i32 = arith.constant 0 : i32
    %c0_i32_0 = arith.constant 0 : i32
    %c0_i32_1 = arith.constant 0 : i32
    return %c0_i32, %c0_i32_0 : i32, i32
  }
  func.func @transform_4(%arg0: i32) -> (i32, i32) {
    %c0_i32 = arith.constant 0 : i32
    %c0_i32_0 = arith.constant 0 : i32
    %c0_i32_1 = arith.constant 0 : i32
    return %c0_i32, %c0_i32_0 : i32, i32
  }
  func.func @transform_5(%arg0: i32) -> (i32, i32, i32) {
    %c0_i32 = arith.constant 0 : i32
    %c0_i32_0 = arith.constant 0 : i32
    %c0_i32_1 = arith.constant 0 : i32
    return %arg0, %c0_i32, %c0_i32_0 : i32, i32, i32
  }
  func.func @transform_6(%arg0: i32) -> (i32, i32, i32) {
    %c0_i32 = arith.constant 0 : i32
    %c0_i32_0 = arith.constant 0 : i32
    %c0_i32_1 = arith.constant 0 : i32
    return %arg0, %c0_i32, %c0_i32_0 : i32, i32, i32
  }
}

</mosaic_0001>

<llo_original>
// kernel: tpu_custom_call.1
$region0: #{tpu_custom_call.1}
  #allocation0 [shape = 'u32[]', space=smem, size = 0x4, offset = 0x4, fixed_abs, tag = 'smem constant byte address 0x4 - core index']
  #allocation1 [shape = 'u32[144,128]{1,0:T(1,128)}', space=vmem, size = 0x12000, scoped, tag = 'internal scratch']
  %s0 = inlined_call_operand.hbm [shape: bf16[2,16,256], index: 0, kind: input, shape index: {}]
  %s1 = inlined_call_operand.hbm [shape: bf16[256,768], index: 1, kind: input, shape index: {}]
  %s2 = inlined_call_operand.hbm [shape: bf16[256,256], index: 2, kind: input, shape index: {}]
  %s3 = inlined_call_operand.vmem [shape: f32[1,768], index: 3, kind: input, shape index: {}]
  %s4 = inlined_call_operand.vmem [shape: f32[1,256], index: 4, kind: input, shape index: {}]
  %s5 = inlined_call_operand.vmem [shape: f32[2,1,16], index: 5, kind: input, shape index: {}]
  %s6 = inlined_call_operand.hbm [shape: f32[2,16,256], index: 6, kind: output, shape index: {}]
  %s7 = sld [smem:[#allocation0]]
  $region69: #{tpu_custom_call.1} parent=0
    _
  %s9 = ssub.s32 1, %s7
  %s10 = scalar_select 0, %s9, %s7
  $region1: #{tpu_custom_call.1} parent=0
    #allocation2 [shape = 'u8[16384]{0}', space=vmem, size = 0x4000, scoped, tag = 'input window, operand 0']
    #allocation3 [shape = 's32[2]{0}', space=sflag, size = 0x8, scoped, tag = 'scoped memory for tpu_custom_call.1']
    #allocation4 [shape = 's32[2]{0}', space=sflag, size = 0x8, scoped, tag = 'scoped memory for tpu_custom_call.1']
    #allocation5 [shape = 'u8[393216]{0}', space=vmem, size = 0x60000, scoped, tag = 'input window, operand 1, single buffered']
    #allocation6 [shape = 's32[1]{0}', space=sflag, size = 0x4, scoped, tag = 'scoped memory for tpu_custom_call.1']
    #allocation7 [shape = 'u8[131072]{0}', space=vmem, size = 0x20000, scoped, tag = 'input window, operand 2, single buffered']
    #allocation8 [shape = 'u8[32768]{0}', space=vmem, size = 0x8000, scoped, tag = 'output window, operand 0']
    %11 = vsyncpa [#allocation3], 0
    %s12 = scalar_lea.sflag [#allocation3], 1
    %13 = vsyncpa %s12, 0
    %14 = vsyncpa [#allocation6], 0
    %15 = vsyncpa [#allocation4], 0
    %s16 = scalar_lea.sflag [#allocation4], 1
    %17 = vsyncpa %s16, 0
    loop: start=0, step=1, limit=4
    $region2: #{tpu_custom_call.1} parent=1 // loop_pre_header
      _
    $region3: #{tpu_custom_call.1} parent=1 // loop_header
      %s19 = sphi 0, %s23
      %p20 = scmp.ge.s32.totalorder %s19, 4
      %s29 = sphi 0, %s31
      %s32 = sphi 0, %s29
      %s33 = sphi 0, %s32
      %s49 = sphi 0, %s33
      %s53 = sphi 0, %s53
      %s55 = sphi 0, %s53
      %s56 = sphi 0, %s55
      %s70 = sphi 0, %s56
      %s74 = sphi 0, %s74
      %s76 = sphi 0, %s74
      %s77 = sphi 0, %s76
      %s91 = sphi 0, %s77
      %s95 = sphi 0, %s95
      %s97 = sphi 0, %s95
      %s98 = sphi 0, %s97
      %s112 = sphi 0, %s98
      %s116 = sphi 0, %s116
      %s118 = sphi 0, %s116
      %s119 = sphi 0, %s118
      %s133 = sphi 0, %s119
      %s139 = sphi 0, %s141
      %s142 = sphi 0, %s139
      %s143 = sphi 0, %s142
      %s159 = sphi 0, %s143
      %s165 = sphi 0, %s167
      %s168 = sphi 0, %s165
      %s169 = sphi 0, %s168
      %s185 = sphi 0, %s169
    $region4: #{tpu_custom_call.1} parent=1 // loop_header_branch
      %22 = sbr.rel (%p20) target = $region8
    $region5: #{tpu_custom_call.1} parent=1 // loop_body
      %s24 = ssub.s32 %s19, 1
      %s25 = ssub.s32 %s19, 2
      %s26 = sadd.s32 %s19, 1
      %s27 = ssub.s32 %s19, %s26
      %p28 = scmp.eq.s32.totalorder %s27, 0
      %s30 = sadd.s32 %s29, 1
      %s31 = scalar_select %p28, %s29, %s30
      %p34 = pneg %p28
      %p35 = scmp.eq.s32.totalorder %s19, 1
      %p36 = por %p34, %p35
      %p37 = scmp.ne.s32.totalorder %s29, %s32
      %p38 = scmp.eq.s32.totalorder %s19, 0
      %p39 = por %p37, %p38
      %p40 = scmp.ne.s32.totalorder %s29, %s32
      %p41 = scmp.eq.s32.totalorder %s24, 1
      %p42 = por %p40, %p41
      %p43 = scmp.ne.s32.totalorder %s32, %s33
      %p44 = scmp.eq.s32.totalorder %s24, 0
      %p45 = por %p43, %p44
      %p46 = scmp.ne.s32.totalorder %s32, %s33
      %p47 = scmp.eq.s32.totalorder %s25, 1
      %p48 = por %p46, %p47
      %p50 = scmp.ne.s32.totalorder %s33, %s49
      %p51 = scmp.eq.s32.totalorder %s25, 0
      %p52 = por %p50, %p51
      %s54 = sadd.s32 %s53, 1
      %p57 = scmp.eq.s32.totalorder %s19, 1
      %p58 = scmp.ne.s32.totalorder %s53, %s55
      %p59 = scmp.eq.s32.totalorder %s19, 0
      %p60 = por %p58, %p59
      %p61 = scmp.ne.s32.totalorder %s53, %s55
      %p62 = scmp.eq.s32.totalorder %s24, 1
      %p63 = por %p61, %p62
      %p64 = scmp.ne.s32.totalorder %s55, %s56
      %p65 = scmp.eq.s32.totalorder %s24, 0
      %p66 = por %p64, %p65
      %p67 = scmp.ne.s32.totalorder %s55, %s56
      %p68 = scmp.eq.s32.totalorder %s25, 1
      %p69 = por %p67, %p68
      %p71 = scmp.ne.s32.totalorder %s56, %s70
      %p72 = scmp.eq.s32.totalorder %s25, 0
      %p73 = por %p71, %p72
      %s75 = sadd.s32 %s74, 1
      %p78 = scmp.eq.s32.totalorder %s19, 1
      %p79 = scmp.ne.s32.totalorder %s74, %s76
      %p80 = scmp.eq.s32.totalorder %s19, 0
      %p81 = por %p79, %p80
      %p82 = scmp.ne.s32.totalorder %s74, %s76
      %p83 = scmp.eq.s32.totalorder %s24, 1
      %p84 = por %p82, %p83
      %p85 = scmp.ne.s32.totalorder %s76, %s77
      %p86 = scmp.eq.s32.totalorder %s24, 0
      %p87 = por %p85, %p86
      %p88 = scmp.ne.s32.totalorder %s76, %s77
      %p89 = scmp.eq.s32.totalorder %s25, 1
      %p90 = por %p88, %p89
      %p92 = scmp.ne.s32.totalorder %s77, %s91
      %p93 = scmp.eq.s32.totalorder %s25, 0
      %p94 = por %p92, %p93
      %s96 = sadd.s32 %s95, 1
      %p99 = scmp.eq.s32.totalorder %s19, 1
      %p100 = scmp.ne.s32.totalorder %s95, %s97
      %p101 = scmp.eq.s32.totalorder %s19, 0
      %p102 = por %p100, %p101
      %p103 = scmp.ne.s32.totalorder %s95, %s97
      %p104 = scmp.eq.s32.totalorder %s24, 1
      %p105 = por %p103, %p104
      %p106 = scmp.ne.s32.totalorder %s97, %s98
      %p107 = scmp.eq.s32.totalorder %s24, 0
      %p108 = por %p106, %p107
      %p109 = scmp.ne.s32.totalorder %s97, %s98
      %p110 = scmp.eq.s32.totalorder %s25, 1
      %p111 = por %p109, %p110
      %p113 = scmp.ne.s32.totalorder %s98, %s112
      %p114 = scmp.eq.s32.totalorder %s25, 0
      %p115 = por %p113, %p114
      %s117 = sadd.s32 %s116, 1
      %p120 = scmp.eq.s32.totalorder %s19, 1
      %p121 = scmp.ne.s32.totalorder %s116, %s118
      %p122 = scmp.eq.s32.totalorder %s19, 0
      %p123 = por %p121, %p122
      %p124 = scmp.ne.s32.totalorder %s116, %s118
      %p125 = scmp.eq.s32.totalorder %s24, 1
      %p126 = por %p124, %p125
      %p127 = scmp.ne.s32.totalorder %s118, %s119
      %p128 = scmp.eq.s32.totalorder %s24, 0
      %p129 = por %p127, %p128
      %p130 = scmp.ne.s32.totalorder %s118, %s119
      %p131 = scmp.eq.s32.totalorder %s25, 1
      %p132 = por %p130, %p131
      %p134 = scmp.ne.s32.totalorder %s119, %s133
      %p135 = scmp.eq.s32.totalorder %s25, 0
      %p136 = por %p134, %p135
      %s137 = ssub.s32 %s19, %s26
      %p138 = scmp.eq.s32.totalorder %s137, 0
      %s140 = sadd.s32 %s139, 1
      %s141 = scalar_select %p138, %s139, %s140
      %p144 = pneg %p138
      %p145 = scmp.eq.s32.totalorder %s19, 1
      %p146 = por %p144, %p145
      %p147 = scmp.ne.s32.totalorder %s139, %s142
      %p148 = scmp.eq.s32.totalorder %s19, 0
      %p149 = por %p147, %p148
      %p150 = scmp.ne.s32.totalorder %s139, %s142
      %p151 = scmp.eq.s32.totalorder %s24, 1
      %p152 = por %p150, %p151
      %p153 = scmp.ne.s32.totalorder %s142, %s143
      %p154 = scmp.eq.s32.totalorder %s24, 0
      %p155 = por %p153, %p154
      %p156 = scmp.ne.s32.totalorder %s142, %s143
      %p157 = scmp.eq.s32.totalorder %s25, 1
      %p158 = por %p156, %p157
      %p160 = scmp.ne.s32.totalorder %s143, %s159
      %p161 = scmp.eq.s32.totalorder %s25, 0
      %p162 = por %p160, %p161
      %s163 = ssub.s32 %s19, %s26
      %p164 = scmp.eq.s32.totalorder %s163, 0
      %s166 = sadd.s32 %s165, 1
      %s167 = scalar_select %p164, %s165, %s166
      %p170 = pneg %p164
      %p171 = scmp.eq.s32.totalorder %s19, 1
      %p172 = por %p170, %p171
      %p173 = scmp.ne.s32.totalorder %s165, %s168
      %p174 = scmp.eq.s32.totalorder %s19, 0
      %p175 = por %p173, %p174
      %p176 = scmp.ne.s32.totalorder %s165, %s168
      %p177 = scmp.eq.s32.totalorder %s24, 1
      %p178 = por %p176, %p177
      %p179 = scmp.ne.s32.totalorder %s168, %s169
      %p180 = scmp.eq.s32.totalorder %s24, 0
      %p181 = por %p179, %p180
      %p182 = scmp.ne.s32.totalorder %s168, %s169
      %p183 = scmp.eq.s32.totalorder %s25, 1
      %p184 = por %p182, %p183
      %p186 = scmp.ne.s32.totalorder %s169, %s185
      %p187 = scmp.eq.s32.totalorder %s25, 0
      %p188 = por %p186, %p187
      %p189 = scmp.le.s32.totalorder 1, %s19
      %p190 = scmp.lt.s32.totalorder %s19, 3
      %p191 = pnand %p189, %p190
      %p192 = pneg %p191
      // Predicated region
      $region9: #{tpu_custom_call.1} parent=5 // pred_check
        _
      $region10: #{tpu_custom_call.1} parent=5 // pred_check_branch
        %194 = sbr.rel (%p191) target = $region12
      $region11: #{tpu_custom_call.1} parent=5 // pred_region
        %s195 = ssub.s32 %s19, 1
        // Predicated region
        $region13: #{tpu_custom_call.1} parent=11 // pred_check
          %p196 = pneg %p66
        $region14: #{tpu_custom_call.1} parent=11 // pred_check_branch
          %198 = sbr.rel (%p196) target = $region16
        $region15: #{tpu_custom_call.1} parent=11 // pred_region
          %s200 = ssub.s32 12288, 12288
          %201 = vsyncadd [#allocation6], %s200
          %s202 = sshll.u32 [#allocation5], 4
          %s203 = int_to_ptr.vmem [resolvable:$true] %s202
          %208 = dma.hbm_to_vmem [thread:$0]  %s1, 12288, %s203, [#allocation6], 384, 384, 24
        $region16: #{tpu_custom_call.1} parent=11 // pred_fallthru
          _
        // Predicated region
        $region17: #{tpu_custom_call.1} parent=11 // pred_check
          %p209 = pneg %p87
        $region18: #{tpu_custom_call.1} parent=11 // pred_check_branch
          %211 = sbr.rel (%p209) target = $region20
        $region19: #{tpu_custom_call.1} parent=11 // pred_region
          %s213 = ssub.s32 4096, 4096
          %214 = vsyncadd [#allocation6], %s213
          %s215 = sshll.u32 [#allocation7], 4
          %s216 = int_to_ptr.vmem [resolvable:$true] %s215
          %221 = dma.hbm_to_vmem [thread:$0]  %s2, 4096, %s216, [#allocation6], 128, 128, 8
        $region20: #{tpu_custom_call.1} parent=11 // pred_fallthru
          _
        // Predicated region
        $region21: #{tpu_custom_call.1} parent=11 // pred_check
          %p222 = pneg %p108
        $region22: #{tpu_custom_call.1} parent=11 // pred_check_branch
          %224 = sbr.rel (%p222) target = $region24
        $region23: #{tpu_custom_call.1} parent=11 // pred_region
          _
        $region24: #{tpu_custom_call.1} parent=11 // pred_fallthru
          _
        // Predicated region
        $region25: #{tpu_custom_call.1} parent=11 // pred_check
          %p225 = pneg %p129
        $region26: #{tpu_custom_call.1} parent=11 // pred_check_branch
          %227 = sbr.rel (%p225) target = $region28
        $region27: #{tpu_custom_call.1} parent=11 // pred_region
          _
        $region28: #{tpu_custom_call.1} parent=11 // pred_fallthru
          _
      $region12: #{tpu_custom_call.1} parent=5 // pred_fallthru
        _
      %p228 = scmp.lt.s32.totalorder %s19, 2
      // Predicated region
      $region29: #{tpu_custom_call.1} parent=5 // pred_check
        %p229 = pneg %p228
      $region30: #{tpu_custom_call.1} parent=5 // pred_check_branch
        %231 = sbr.rel (%p229) target = $region32
      $region31: #{tpu_custom_call.1} parent=5 // pred_region
        // Predicated region
        $region33: #{tpu_custom_call.1} parent=31 // pred_check
          %p232 = pneg %p39
        $region34: #{tpu_custom_call.1} parent=31 // pred_check_branch
          %234 = sbr.rel (%p232) target = $region36
        $region35: #{tpu_custom_call.1} parent=31 // pred_region
          %s235 = sand.u32 %s29, 1
          %s236 = scalar_lea.sflag [#allocation3], %s235
          %s237 = sand.u32 %s29, 1
          %s238 = smul.addr %s237, 16
          %s239 = scalar_lea.vmem [#allocation2], %s238
          %s241 = ssub.s32 256, 256
          %242 = vsyncadd %s236, %s241
          %s243 = smul.addr %s19, 4
          %s244 = smul.addr %s243, 64
          %s245 = scalar_lea.hbm %s0, %s244
          %s246 = sshll.u32 %s239, 4
          %s247 = int_to_ptr.vmem [resolvable:$true] %s246
          %252 = dma.hbm_to_vmem [thread:$0]  %s245, 256, %s247, %s236, 128, 128, 8
        $region36: #{tpu_custom_call.1} parent=31 // pred_fallthru
          _
        // Predicated region
        $region37: #{tpu_custom_call.1} parent=31 // pred_check
          %p253 = pneg %p149
        $region38: #{tpu_custom_call.1} parent=31 // pred_check_branch
          %255 = sbr.rel (%p253) target = $region40
        $region39: #{tpu_custom_call.1} parent=31 // pred_region
          %p256 = scmp.lt.s32.totalorder %s19, 1
          %s257 = scalar_select %p256, %s19, 1
          %s258 = scalar_lea.vmem %s5, %s257
        $region40: #{tpu_custom_call.1} parent=31 // pred_fallthru
          _
      $region32: #{tpu_custom_call.1} parent=5 // pred_fallthru
        _
      %p259 = scmp.le.s32.totalorder 1, %s19
      %p260 = scmp.lt.s32.totalorder %s19, 3
      %p261 = pnand %p259, %p260
      %p262 = pneg %p261
      // Predicated region
      $region41: #{tpu_custom_call.1} parent=5 // pred_check
        _
      $region42: #{tpu_custom_call.1} parent=5 // pred_check_branch
        %264 = sbr.rel (%p261) target = $region44
      $region43: #{tpu_custom_call.1} parent=5 // pred_region
        %s265 = ssub.s32 %s19, 1
        %s266 = sand.u32 %s32, 1
        %s267 = scalar_lea.sflag [#allocation3], %s266
        %s268 = sand.u32 %s32, 1
        %s269 = smul.addr %s268, 16
        %s270 = scalar_lea.vmem [#allocation2], %s269
        // Predicated region
        $region45: #{tpu_custom_call.1} parent=43 // pred_check
          %p271 = pneg %p45
        $region46: #{tpu_custom_call.1} parent=43 // pred_check_branch
          %273 = sbr.rel (%p271) target = $region48
        $region47: #{tpu_custom_call.1} parent=43 // pred_region
          %274 = dma.done %s267, 256
        $region48: #{tpu_custom_call.1} parent=43 // pred_fallthru
          _
        // Predicated region
        $region49: #{tpu_custom_call.1} parent=43 // pred_check
          %p275 = pneg %p66
        $region50: #{tpu_custom_call.1} parent=43 // pred_check_branch
          %277 = sbr.rel (%p275) target = $region52
        $region51: #{tpu_custom_call.1} parent=43 // pred_region
          %278 = dma.done [#allocation6], 12288
        $region52: #{tpu_custom_call.1} parent=43 // pred_fallthru
          _
        // Predicated region
        $region53: #{tpu_custom_call.1} parent=43 // pred_check
          %p279 = pneg %p87
        $region54: #{tpu_custom_call.1} parent=43 // pred_check_branch
          %281 = sbr.rel (%p279) target = $region56
        $region55: #{tpu_custom_call.1} parent=43 // pred_region
          %282 = dma.done [#allocation6], 4096
        $region56: #{tpu_custom_call.1} parent=43 // pred_fallthru
          _
        %s283 = sand.u32 %s32, 1
        %s284 = scalar_lea.sflag [#allocation3], %s283
        %s285 = sand.u32 %s32, 1
        %s286 = smul.addr %s285, 16
        %s287 = scalar_lea.vmem [#allocation2], %s286
        %p288 = pneg %p45
        %p289 = pneg %p42
        %p290 = pneg %p66
        %p291 = pneg %p63
        %p292 = pneg %p87
        %p293 = pneg %p84
        %p294 = pneg %p108
        %p295 = pneg %p105
        %p296 = pneg %p129
        %p297 = pneg %p126
        %p298 = scmp.lt.s32.totalorder %s24, 1
        %s299 = scalar_select %p298, %s24, 1
        %s300 = scalar_lea.vmem %s5, %s299
        %p301 = pneg %p155
        %p302 = pneg %p152
        %p303 = pneg %p181
        %p304 = pneg %p178
        %s305 = sand.u32 %s168, 1
        %s306 = scalar_lea.sflag [#allocation4], %s305
        %s307 = sand.u32 %s168, 1
        %s308 = smul.addr %s307, 32
        %s309 = scalar_lea.vmem [#allocation8], %s308
        %p310 = scmp.lt.s32.totalorder %s24, 1
        %s311 = scalar_select %p310, %s24, 1
        %s312 = scalar_lea.vmem %s5, %s311
        %v314 = vld [vmem:[%s270] sm:$0xff]
        %v315 = vld [vmem:[%s270 + $0x8] sm:$0xff]
        %v316 = vld [vmem:[#allocation5] sm:$0xff]
        %v317 = vld [vmem:[#allocation5 + $0x8] sm:$0xff]
        %v318 = vld [vmem:[#allocation5 + $0x10] sm:$0xff]
        %v319 = vld [vmem:[#allocation5 + $0x18] sm:$0xff]
        %v320 = vld [vmem:[#allocation5 + $0x20] sm:$0xff]
        %v321 = vld [vmem:[#allocation5 + $0x28] sm:$0xff]
        %v322 = vld [vmem:[#allocation5 + $0x30] sm:$0xff]
        %v323 = vld [vmem:[#allocation5 + $0x38] sm:$0xff]
        %v324 = vld [vmem:[#allocation5 + $0x40] sm:$0xff]
        %v325 = vld [vmem:[#allocation5 + $0x48] sm:$0xff]
        %v326 = vld [vmem:[#allocation5 + $0x50] sm:$0xff]
        %v327 = vld [vmem:[#allocation5 + $0x58] sm:$0xff]
        %v328 = vld [vmem:[#allocation5 + $0x60] sm:$0xff]
        %v329 = vld [vmem:[#allocation5 + $0x68] sm:$0xff]
        %v330 = vld [vmem:[#allocation5 + $0x70] sm:$0xff]
        %v331 = vld [vmem:[#allocation5 + $0x78] sm:$0xff]
        %v332 = vld [vmem:[#allocation5 + $0x80] sm:$0xff]
        %v333 = vld [vmem:[#allocation5 + $0x88] sm:$0xff]
        %v334 = vld [vmem:[#allocation5 + $0x90] sm:$0xff]
        %v335 = vld [vmem:[#allocation5 + $0x98] sm:$0xff]
        %v336 = vld [vmem:[#allocation5 + $0xa0] sm:$0xff]
        %v337 = vld [vmem:[#allocation5 + $0xa8] sm:$0xff]
        %v338 = vld [vmem:[#allocation5 + $0xb0] sm:$0xff]
        %v339 = vld [vmem:[#allocation5 + $0xb8] sm:$0xff]
        %v340 = vld [vmem:[#allocation5 + $0xc0] sm:$0xff]
        %v341 = vld [vmem:[#allocation5 + $0xc8] sm:$0xff]
        %v342 = vld [vmem:[#allocation5 + $0xd0] sm:$0xff]
        %v343 = vld [vmem:[#allocation5 + $0xd8] sm:$0xff]
        %v344 = vld [vmem:[#allocation5 + $0xe0] sm:$0xff]
        %v345 = vld [vmem:[#allocation5 + $0xe8] sm:$0xff]
        %v346 = vld [vmem:[#allocation5 + $0xf0] sm:$0xff]
        %v347 = vld [vmem:[#allocation5 + $0xf8] sm:$0xff]
        %v348 = vld [vmem:[#allocation5 + $0x100] sm:$0xff]
        %v349 = vld [vmem:[#allocation5 + $0x108] sm:$0xff]
        %v350 = vld [vmem:[#allocation5 + $0x110] sm:$0xff]
        %v351 = vld [vmem:[#allocation5 + $0x118] sm:$0xff]
        %v352 = vld [vmem:[#allocation5 + $0x120] sm:$0xff]
        %v353 = vld [vmem:[#allocation5 + $0x128] sm:$0xff]
        %v354 = vld [vmem:[#allocation5 + $0x130] sm:$0xff]
        %v355 = vld [vmem:[#allocation5 + $0x138] sm:$0xff]
        %v356 = vld [vmem:[#allocation5 + $0x140] sm:$0xff]
        %v357 = vld [vmem:[#allocation5 + $0x148] sm:$0xff]
        %v358 = vld [vmem:[#allocation5 + $0x150] sm:$0xff]
        %v359 = vld [vmem:[#allocation5 + $0x158] sm:$0xff]
        %v360 = vld [vmem:[#allocation5 + $0x160] sm:$0xff]
        %v361 = vld [vmem:[#allocation5 + $0x168] sm:$0xff]
        %v362 = vld [vmem:[#allocation5 + $0x170] sm:$0xff]
        %v363 = vld [vmem:[#allocation5 + $0x178] sm:$0xff]
        %v364 = vld [vmem:[#allocation5 + $0x180] sm:$0xff]
        %v365 = vld [vmem:[#allocation5 + $0x188] sm:$0xff]
        %v366 = vld [vmem:[#allocation5 + $0x190] sm:$0xff]
        %v367 = vld [vmem:[#allocation5 + $0x198] sm:$0xff]
        %v368 = vld [vmem:[#allocation5 + $0x1a0] sm:$0xff]
        %v369 = vld [vmem:[#allocation5 + $0x1a8] sm:$0xff]
        %v370 = vld [vmem:[#allocation5 + $0x1b0] sm:$0xff]
        %v371 = vld [vmem:[#allocation5 + $0x1b8] sm:$0xff]
        %v372 = vld [vmem:[#allocation5 + $0x1c0] sm:$0xff]
        %v373 = vld [vmem:[#allocation5 + $0x1c8] sm:$0xff]
        %v374 = vld [vmem:[#allocation5 + $0x1d0] sm:$0xff]
        %v375 = vld [vmem:[#allocation5 + $0x1d8] sm:$0xff]
        %v376 = vld [vmem:[#allocation5 + $0x1e0] sm:$0xff]
        %v377 = vld [vmem:[#allocation5 + $0x1e8] sm:$0xff]
        %v378 = vld [vmem:[#allocation5 + $0x1f0] sm:$0xff]
        %v379 = vld [vmem:[#allocation5 + $0x1f8] sm:$0xff]
        %v380 = vld [vmem:[#allocation5 + $0x200] sm:$0xff]
        %v381 = vld [vmem:[#allocation5 + $0x208] sm:$0xff]
        %v382 = vld [vmem:[#allocation5 + $0x210] sm:$0xff]
        %v383 = vld [vmem:[#allocation5 + $0x218] sm:$0xff]
        %v384 = vld [vmem:[#allocation5 + $0x220] sm:$0xff]
        %v385 = vld [vmem:[#allocation5 + $0x228] sm:$0xff]
        %v386 = vld [vmem:[#allocation5 + $0x230] sm:$0xff]
        %v387 = vld [vmem:[#allocation5 + $0x238] sm:$0xff]
        %v388 = vld [vmem:[#allocation5 + $0x240] sm:$0xff]
        %v389 = vld [vmem:[#allocation5 + $0x248] sm:$0xff]
        %v390 = vld [vmem:[#allocation5 + $0x250] sm:$0xff]
        %v391 = vld [vmem:[#allocation5 + $0x258] sm:$0xff]
        %v392 = vld [vmem:[#allocation5 + $0x260] sm:$0xff]
        %v393 = vld [vmem:[#allocation5 + $0x268] sm:$0xff]
        %v394 = vld [vmem:[#allocation5 + $0x270] sm:$0xff]
        %v395 = vld [vmem:[#allocation5 + $0x278] sm:$0xff]
        %v396 = vld [vmem:[#allocation5 + $0x280] sm:$0xff]
        %v397 = vld [vmem:[#allocation5 + $0x288] sm:$0xff]
        %v398 = vld [vmem:[#allocation5 + $0x290] sm:$0xff]
        %v399 = vld [vmem:[#allocation5 + $0x298] sm:$0xff]
        %v400 = vld [vmem:[#allocation5 + $0x2a0] sm:$0xff]
        %v401 = vld [vmem:[#allocation5 + $0x2a8] sm:$0xff]
        %v402 = vld [vmem:[#allocation5 + $0x2b0] sm:$0xff]
        %v403 = vld [vmem:[#allocation5 + $0x2b8] sm:$0xff]
        %v404 = vld [vmem:[#allocation5 + $0x2c0] sm:$0xff]
        %v405 = vld [vmem:[#allocation5 + $0x2c8] sm:$0xff]
        %v406 = vld [vmem:[#allocation5 + $0x2d0] sm:$0xff]
        %v407 = vld [vmem:[#allocation5 + $0x2d8] sm:$0xff]
        %v408 = vld [vmem:[#allocation5 + $0x2e0] sm:$0xff]
        %v409 = vld [vmem:[#allocation5 + $0x2e8] sm:$0xff]
        %v410 = vld [vmem:[#allocation5 + $0x2f0] sm:$0xff]
        %v411 = vld [vmem:[#allocation5 + $0x2f8] sm:$0xff]
        %v412 = vld [vmem:[%s3] sm:$0x3f]
        %v414 = vlaneseq
        %v415 = vshrl.u32 %v414, 7
        %v416 = vsub.s32 0, %v415
        %v417 = vrot.slane %v412, %v416
        %v418 = vlaneseq
        %v419 = vshrl.u32 %v418, 7
        %v420 = vsub.s32 1, %v419
        %v421 = vrot.slane %v412, %v420
        %v422 = vlaneseq
        %v423 = vshrl.u32 %v422, 7
        %v424 = vsub.s32 2, %v423
        %v425 = vrot.slane %v412, %v424
        %v426 = vlaneseq
        %v427 = vshrl.u32 %v426, 7
        %v428 = vsub.s32 3, %v427
        %v429 = vrot.slane %v412, %v428
        %v430 = vlaneseq
        %v431 = vshrl.u32 %v430, 7
        %v432 = vsub.s32 4, %v431
        %v433 = vrot.slane %v412, %v432
        %v434 = vlaneseq
        %v435 = vshrl.u32 %v434, 7
        %v436 = vsub.s32 5, %v435
        %v437 = vrot.slane %v412, %v436
        %v446 = vunpack.c.l.b16 %v314
        %v447 = vunpack.c.h.b16 %v314
        %v448 = vunpack.c.l.b16 %v315
        %v449 = vunpack.c.h.b16 %v315
        %v450 = vpack.c.b16 %v448, %v446
        %v451 = vpack.c.b16 %v449, %v447
        %v550 = vunpack.c.l.b16 %v316
        %v551 = vunpack.c.h.b16 %v316
        %v552 = vunpack.c.l.b16 %v317
        %v553 = vunpack.c.h.b16 %v317
        %v554 = vunpack.c.l.b16 %v318
        %v555 = vunpack.c.h.b16 %v318
        %v556 = vunpack.c.l.b16 %v319
        %v557 = vunpack.c.h.b16 %v319
        %v558 = vunpack.c.l.b16 %v320
        %v559 = vunpack.c.h.b16 %v320
        %v560 = vunpack.c.l.b16 %v321
        %v561 = vunpack.c.h.b16 %v321
        %v562 = vunpack.c.l.b16 %v322
        %v563 = vunpack.c.h.b16 %v322
        %v564 = vunpack.c.l.b16 %v323
        %v565 = vunpack.c.h.b16 %v323
        %v566 = vunpack.c.l.b16 %v324
        %v567 = vunpack.c.h.b16 %v324
        %v568 = vunpack.c.l.b16 %v325
        %v569 = vunpack.c.h.b16 %v325
        %v570 = vunpack.c.l.b16 %v326
        %v571 = vunpack.c.h.b16 %v326
        %v572 = vunpack.c.l.b16 %v327
        %v573 = vunpack.c.h.b16 %v327
        %v574 = vunpack.c.l.b16 %v328
        %v575 = vunpack.c.h.b16 %v328
        %v576 = vunpack.c.l.b16 %v329
        %v577 = vunpack.c.h.b16 %v329
        %v578 = vunpack.c.l.b16 %v330
        %v579 = vunpack.c.h.b16 %v330
        %v580 = vunpack.c.l.b16 %v331
        %v581 = vunpack.c.h.b16 %v331
        %v582 = vunpack.c.l.b16 %v332
        %v583 = vunpack.c.h.b16 %v332
        %v584 = vunpack.c.l.b16 %v333
        %v585 = vunpack.c.h.b16 %v333
        %v586 = vunpack.c.l.b16 %v334
        %v587 = vunpack.c.h.b16 %v334
        %v588 = vunpack.c.l.b16 %v335
        %v589 = vunpack.c.h.b16 %v335
        %v590 = vunpack.c.l.b16 %v336
        %v591 = vunpack.c.h.b16 %v336
        %v592 = vunpack.c.l.b16 %v337
        %v593 = vunpack.c.h.b16 %v337
        %v594 = vunpack.c.l.b16 %v338
        %v595 = vunpack.c.h.b16 %v338
        %v596 = vunpack.c.l.b16 %v339
        %v597 = vunpack.c.h.b16 %v339
        %v598 = vunpack.c.l.b16 %v340
        %v599 = vunpack.c.h.b16 %v340
        %v600 = vunpack.c.l.b16 %v341
        %v601 = vunpack.c.h.b16 %v341
        %v602 = vunpack.c.l.b16 %v342
        %v603 = vunpack.c.h.b16 %v342
        %v604 = vunpack.c.l.b16 %v343
        %v605 = vunpack.c.h.b16 %v343
        %v606 = vunpack.c.l.b16 %v344
        %v607 = vunpack.c.h.b16 %v344
        %v608 = vunpack.c.l.b16 %v345
        %v609 = vunpack.c.h.b16 %v345
        %v610 = vunpack.c.l.b16 %v346
        %v611 = vunpack.c.h.b16 %v346
        %v612 = vunpack.c.l.b16 %v347
        %v613 = vunpack.c.h.b16 %v347
        %v614 = vunpack.c.l.b16 %v348
        %v615 = vunpack.c.h.b16 %v348
        %v616 = vunpack.c.l.b16 %v349
        %v617 = vunpack.c.h.b16 %v349
        %v618 = vunpack.c.l.b16 %v350
        %v619 = vunpack.c.h.b16 %v350
        %v620 = vunpack.c.l.b16 %v351
        %v621 = vunpack.c.h.b16 %v351
        %v622 = vunpack.c.l.b16 %v352
        %v623 = vunpack.c.h.b16 %v352
        %v624 = vunpack.c.l.b16 %v353
        %v625 = vunpack.c.h.b16 %v353
        %v626 = vunpack.c.l.b16 %v354
        %v627 = vunpack.c.h.b16 %v354
        %v628 = vunpack.c.l.b16 %v355
        %v629 = vunpack.c.h.b16 %v355
        %v630 = vunpack.c.l.b16 %v356
        %v631 = vunpack.c.h.b16 %v356
        %v632 = vunpack.c.l.b16 %v357
        %v633 = vunpack.c.h.b16 %v357
        %v634 = vunpack.c.l.b16 %v358
        %v635 = vunpack.c.h.b16 %v358
        %v636 = vunpack.c.l.b16 %v359
        %v637 = vunpack.c.h.b16 %v359
        %v638 = vunpack.c.l.b16 %v360
        %v639 = vunpack.c.h.b16 %v360
        %v640 = vunpack.c.l.b16 %v361
        %v641 = vunpack.c.h.b16 %v361
        %v642 = vunpack.c.l.b16 %v362
        %v643 = vunpack.c.h.b16 %v362
        %v644 = vunpack.c.l.b16 %v363
        %v645 = vunpack.c.h.b16 %v363
        %v646 = vunpack.c.l.b16 %v364
        %v647 = vunpack.c.h.b16 %v364
        %v648 = vunpack.c.l.b16 %v365
        %v649 = vunpack.c.h.b16 %v365
        %v650 = vunpack.c.l.b16 %v366
        %v651 = vunpack.c.h.b16 %v366
        %v652 = vunpack.c.l.b16 %v367
        %v653 = vunpack.c.h.b16 %v367
        %v654 = vunpack.c.l.b16 %v368
        %v655 = vunpack.c.h.b16 %v368
        %v656 = vunpack.c.l.b16 %v369
        %v657 = vunpack.c.h.b16 %v369
        %v658 = vunpack.c.l.b16 %v370
        %v659 = vunpack.c.h.b16 %v370
        %v660 = vunpack.c.l.b16 %v371
        %v661 = vunpack.c.h.b16 %v371
        %v662 = vunpack.c.l.b16 %v372
        %v663 = vunpack.c.h.b16 %v372
        %v664 = vunpack.c.l.b16 %v373
        %v665 = vunpack.c.h.b16 %v373
        %v666 = vunpack.c.l.b16 %v374
        %v667 = vunpack.c.h.b16 %v374
        %v668 = vunpack.c.l.b16 %v375
        %v669 = vunpack.c.h.b16 %v375
        %v670 = vunpack.c.l.b16 %v376
        %v671 = vunpack.c.h.b16 %v376
        %v672 = vunpack.c.l.b16 %v377
        %v673 = vunpack.c.h.b16 %v377
        %v674 = vunpack.c.l.b16 %v378
        %v675 = vunpack.c.h.b16 %v378
        %v676 = vunpack.c.l.b16 %v379
        %v677 = vunpack.c.h.b16 %v379
        %v678 = vunpack.c.l.b16 %v380
        %v679 = vunpack.c.h.b16 %v380
        %v680 = vunpack.c.l.b16 %v381
        %v681 = vunpack.c.h.b16 %v381
        %v682 = vunpack.c.l.b16 %v382
        %v683 = vunpack.c.h.b16 %v382
        %v684 = vunpack.c.l.b16 %v383
        %v685 = vunpack.c.h.b16 %v383
        %v686 = vunpack.c.l.b16 %v384
        %v687 = vunpack.c.h.b16 %v384
        %v688 = vunpack.c.l.b16 %v385
        %v689 = vunpack.c.h.b16 %v385
        %v690 = vunpack.c.l.b16 %v386
        %v691 = vunpack.c.h.b16 %v386
        %v692 = vunpack.c.l.b16 %v387
        %v693 = vunpack.c.h.b16 %v387
        %v694 = vunpack.c.l.b16 %v388
        %v695 = vunpack.c.h.b16 %v388
        %v696 = vunpack.c.l.b16 %v389
        %v697 = vunpack.c.h.b16 %v389
        %v698 = vunpack.c.l.b16 %v390
        %v699 = vunpack.c.h.b16 %v390
        %v700 = vunpack.c.l.b16 %v391
        %v701 = vunpack.c.h.b16 %v391
        %v702 = vunpack.c.l.b16 %v392
        %v703 = vunpack.c.h.b16 %v392
        %v704 = vunpack.c.l.b16 %v393
        %v705 = vunpack.c.h.b16 %v393
        %v706 = vunpack.c.l.b16 %v394
        %v707 = vunpack.c.h.b16 %v394
        %v708 = vunpack.c.l.b16 %v395
        %v709 = vunpack.c.h.b16 %v395
        %v710 = vunpack.c.l.b16 %v396
        %v711 = vunpack.c.h.b16 %v396
        %v712 = vunpack.c.l.b16 %v397
        %v713 = vunpack.c.h.b16 %v397
        %v714 = vunpack.c.l.b16 %v398
        %v715 = vunpack.c.h.b16 %v398
        %v716 = vunpack.c.l.b16 %v399
        %v717 = vunpack.c.h.b16 %v399
        %v718 = vunpack.c.l.b16 %v400
        %v719 = vunpack.c.h.b16 %v400
        %v720 = vunpack.c.l.b16 %v401
        %v721 = vunpack.c.h.b16 %v401
        %v722 = vunpack.c.l.b16 %v402
        %v723 = vunpack.c.h.b16 %v402
        %v724 = vunpack.c.l.b16 %v403
        %v725 = vunpack.c.h.b16 %v403
        %v726 = vunpack.c.l.b16 %v404
        %v727 = vunpack.c.h.b16 %v404
        %v728 = vunpack.c.l.b16 %v405
        %v729 = vunpack.c.h.b16 %v405
        %v730 = vunpack.c.l.b16 %v406
        %v731 = vunpack.c.h.b16 %v406
        %v732 = vunpack.c.l.b16 %v407
        %v733 = vunpack.c.h.b16 %v407
        %v734 = vunpack.c.l.b16 %v408
        %v735 = vunpack.c.h.b16 %v408
        %v736 = vunpack.c.l.b16 %v409
        %v737 = vunpack.c.h.b16 %v409
        %v738 = vunpack.c.l.b16 %v410
        %v739 = vunpack.c.h.b16 %v410
        %v740 = vunpack.c.l.b16 %v411
        %v741 = vunpack.c.h.b16 %v411
        %v742 = vpack.c.b16 %v556, %v550
        %v743 = vpack.c.b16 %v557, %v551
        %v744 = vpack.c.b16 %v558, %v552
        %v745 = vpack.c.b16 %v559, %v553
        %v746 = vpack.c.b16 %v560, %v554
        %v747 = vpack.c.b16 %v561, %v555
        %v748 = vpack.c.b16 %v568, %v562
        %v749 = vpack.c.b16 %v569, %v563
        %v750 = vpack.c.b16 %v570, %v564
        %v751 = vpack.c.b16 %v571, %v565
        %v752 = vpack.c.b16 %v572, %v566
        %v753 = vpack.c.b16 %v573, %v567
        %v754 = vpack.c.b16 %v580, %v574
        %v755 = vpack.c.b16 %v581, %v575
        %v756 = vpack.c.b16 %v582, %v576
        %v757 = vpack.c.b16 %v583, %v577
        %v758 = vpack.c.b16 %v584, %v578
        %v759 = vpack.c.b16 %v585, %v579
        %v760 = vpack.c.b16 %v592, %v586
        %v761 = vpack.c.b16 %v593, %v587
        %v762 = vpack.c.b16 %v594, %v588
        %v763 = vpack.c.b16 %v595, %v589
        %v764 = vpack.c.b16 %v596, %v590
        %v765 = vpack.c.b16 %v597, %v591
        %v766 = vpack.c.b16 %v604, %v598
        %v767 = vpack.c.b16 %v605, %v599
        %v768 = vpack.c.b16 %v606, %v600
        %v769 = vpack.c.b16 %v607, %v601
        %v770 = vpack.c.b16 %v608, %v602
        %v771 = vpack.c.b16 %v609, %v603
        %v772 = vpack.c.b16 %v616, %v610
        %v773 = vpack.c.b16 %v617, %v611
        %v774 = vpack.c.b16 %v618, %v612
        %v775 = vpack.c.b16 %v619, %v613
        %v776 = vpack.c.b16 %v620, %v614
        %v777 = vpack.c.b16 %v621, %v615
        %v778 = vpack.c.b16 %v628, %v622
        %v779 = vpack.c.b16 %v629, %v623
        %v780 = vpack.c.b16 %v630, %v624
        %v781 = vpack.c.b16 %v631, %v625
        %v782 = vpack.c.b16 %v632, %v626
        %v783 = vpack.c.b16 %v633, %v627
        %v784 = vpack.c.b16 %v640, %v634
        %v785 = vpack.c.b16 %v641, %v635
        %v786 = vpack.c.b16 %v642, %v636
        %v787 = vpack.c.b16 %v643, %v637
        %v788 = vpack.c.b16 %v644, %v638
        %v789 = vpack.c.b16 %v645, %v639
        %v790 = vpack.c.b16 %v652, %v646
        %v791 = vpack.c.b16 %v653, %v647
        %v792 = vpack.c.b16 %v654, %v648
        %v793 = vpack.c.b16 %v655, %v649
        %v794 = vpack.c.b16 %v656, %v650
        %v795 = vpack.c.b16 %v657, %v651
        %v796 = vpack.c.b16 %v664, %v658
        %v797 = vpack.c.b16 %v665, %v659
        %v798 = vpack.c.b16 %v666, %v660
        %v799 = vpack.c.b16 %v667, %v661
        %v800 = vpack.c.b16 %v668, %v662
        %v801 = vpack.c.b16 %v669, %v663
        %v802 = vpack.c.b16 %v676, %v670
        %v803 = vpack.c.b16 %v677, %v671
        %v804 = vpack.c.b16 %v678, %v672
        %v805 = vpack.c.b16 %v679, %v673
        %v806 = vpack.c.b16 %v680, %v674
        %v807 = vpack.c.b16 %v681, %v675
        %v808 = vpack.c.b16 %v688, %v682
        %v809 = vpack.c.b16 %v689, %v683
        %v810 = vpack.c.b16 %v690, %v684
        %v811 = vpack.c.b16 %v691, %v685
        %v812 = vpack.c.b16 %v692, %v686
        %v813 = vpack.c.b16 %v693, %v687
        %v814 = vpack.c.b16 %v700, %v694
        %v815 = vpack.c.b16 %v701, %v695
        %v816 = vpack.c.b16 %v702, %v696
        %v817 = vpack.c.b16 %v703, %v697
        %v818 = vpack.c.b16 %v704, %v698
        %v819 = vpack.c.b16 %v705, %v699
        %v820 = vpack.c.b16 %v712, %v706
        %v821 = vpack.c.b16 %v713, %v707
        %v822 = vpack.c.b16 %v714, %v708
        %v823 = vpack.c.b16 %v715, %v709
        %v824 = vpack.c.b16 %v716, %v710
        %v825 = vpack.c.b16 %v717, %v711
        %v826 = vpack.c.b16 %v724, %v718
        %v827 = vpack.c.b16 %v725, %v719
        %v828 = vpack.c.b16 %v726, %v720
        %v829 = vpack.c.b16 %v727, %v721
        %v830 = vpack.c.b16 %v728, %v722
        %v831 = vpack.c.b16 %v729, %v723
        %v832 = vpack.c.b16 %v736, %v730
        %v833 = vpack.c.b16 %v737, %v731
        %v834 = vpack.c.b16 %v738, %v732
        %v835 = vpack.c.b16 %v739, %v733
        %v836 = vpack.c.b16 %v740, %v734
        %v837 = vpack.c.b16 %v741, %v735
        %934 = vmatprep.subr.bf16.mxu0 %v743
        %935 = vmatpush1.bf16.msra.mxu0 %v742
        %936 = vmatprep.subr.bf16.mxu0 %v749
        %937 = vmatpush1.bf16.msra.mxu0 %v748
        %938 = vmatprep.subr.bf16.mxu0 %v755
        %939 = vmatpush1.bf16.msra.mxu0 %v754
        %940 = vmatprep.subr.bf16.mxu0 %v761
        %941 = vmatpush1.bf16.msra.mxu0 %v760
        %942 = vmatprep.subr.bf16.mxu0 %v767
        %943 = vmatpush1.bf16.msra.mxu0 %v766
        %944 = vmatprep.subr.bf16.mxu0 %v773
        %945 = vmatpush1.bf16.msra.mxu0 %v772
        %946 = vmatprep.subr.bf16.mxu0 %v779
        %947 = vmatpush1.bf16.msra.mxu0 %v778
        %948 = vmatprep.subr.bf16.mxu0 %v785
        %949 = vmatpush1.bf16.msra.mxu0 %v784
        %950 = vmatprep.subr.bf16.mxu0 %v791
        %951 = vmatpush1.bf16.msra.mxu0 %v790
        %952 = vmatprep.subr.bf16.mxu0 %v797
        %953 = vmatpush1.bf16.msra.mxu0 %v796
        %954 = vmatprep.subr.bf16.mxu0 %v803
        %955 = vmatpush1.bf16.msra.mxu0 %v802
        %956 = vmatprep.subr.bf16.mxu0 %v809
        %957 = vmatpush1.bf16.msra.mxu0 %v808
        %958 = vmatprep.subr.bf16.mxu0 %v815
        %959 = vmatpush1.bf16.msra.mxu0 %v814
        %960 = vmatprep.subr.bf16.mxu0 %v821
        %961 = vmatpush1.bf16.msra.mxu0 %v820
        %962 = vmatprep.subr.bf16.mxu0 %v827
        %963 = vmatpush1.bf16.msra.mxu0 %v826
        %964 = vmatprep.subr.bf16.mxu0 %v833
        %965 = vmatpush1.bf16.msra.mxu0 %v832
        %966 = vmatprep.mubr.bf16.mxu0 %v451
        %967 = vmatmul.mubr.bf16.gmra.mrb[0].mxu0 %v450
        %v968 = vpop.f32.mrb[0].mxu0
        %v969 = vadd.f32 %v417, %v968
        %v970 = vpop.f32.mrb[0].mxu0
        %v971 = vadd.f32 %v421, %v970
        %v972 = vpop.f32.mrb[0].mxu0
        %v973 = vadd.f32 %v417, %v972
        %v974 = vpop.f32.mrb[0].mxu0
        %v975 = vadd.f32 %v421, %v974
        %976 = vdwg.mxu0
        %977 = vmatprep.subr.bf16.mxu0 %v745
        %978 = vmatpush1.bf16.msra.mxu0 %v744
        %979 = vmatprep.subr.bf16.mxu0 %v751
        %980 = vmatpush1.bf16.msra.mxu0 %v750
        %981 = vmatprep.subr.bf16.mxu0 %v757
        %982 = vmatpush1.bf16.msra.mxu0 %v756
        %983 = vmatprep.subr.bf16.mxu0 %v763
        %984 = vmatpush1.bf16.msra.mxu0 %v762
        %985 = vmatprep.subr.bf16.mxu0 %v769
        %986 = vmatpush1.bf16.msra.mxu0 %v768
        %987 = vmatprep.subr.bf16.mxu0 %v775
        %988 = vmatpush1.bf16.msra.mxu0 %v774
        %989 = vmatprep.subr.bf16.mxu0 %v781
        %990 = vmatpush1.bf16.msra.mxu0 %v780
        %991 = vmatprep.subr.bf16.mxu0 %v787
        %992 = vmatpush1.bf16.msra.mxu0 %v786
        %993 = vmatprep.subr.bf16.mxu0 %v793
        %994 = vmatpush1.bf16.msra.mxu0 %v792
        %995 = vmatprep.subr.bf16.mxu0 %v799
        %996 = vmatpush1.bf16.msra.mxu0 %v798
        %997 = vmatprep.subr.bf16.mxu0 %v805
        %998 = vmatpush1.bf16.msra.mxu0 %v804
        %999 = vmatprep.subr.bf16.mxu0 %v811
        %1000 = vmatpush1.bf16.msra.mxu0 %v810
        %1001 = vmatprep.subr.bf16.mxu0 %v817
        %1002 = vmatpush1.bf16.msra.mxu0 %v816
        %1003 = vmatprep.subr.bf16.mxu0 %v823
        %1004 = vmatpush1.bf16.msra.mxu0 %v822
        %1005 = vmatprep.subr.bf16.mxu0 %v829
        %1006 = vmatpush1.bf16.msra.mxu0 %v828
        %1007 = vmatprep.subr.bf16.mxu0 %v835
        %1008 = vmatpush1.bf16.msra.mxu0 %v834
        %1009 = vmatprep.mubr.bf16.mxu0 %v451
        %1010 = vmatmul.mubr.bf16.gmra.mrb[0].mxu0 %v450
        %v1011 = vpop.f32.mrb[0].mxu0
        %v1012 = vadd.f32 %v425, %v1011
        %v1013 = vpop.f32.mrb[0].mxu0
        %v1014 = vadd.f32 %v429, %v1013
        %v1015 = vpop.f32.mrb[0].mxu0
        %v1016 = vadd.f32 %v425, %v1015
        %v1017 = vpop.f32.mrb[0].mxu0
        %v1018 = vadd.f32 %v429, %v1017
        %1019 = vdwg.mxu0
        %1020 = vmatprep.subr.bf16.mxu0 %v747
        %1021 = vmatpush1.bf16.msra.mxu0 %v746
        %1022 = vmatprep.subr.bf16.mxu0 %v753
        %1023 = vmatpush1.bf16.msra.mxu0 %v752
        %1024 = vmatprep.subr.bf16.mxu0 %v759
        %1025 = vmatpush1.bf16.msra.mxu0 %v758
        %1026 = vmatprep.subr.bf16.mxu0 %v765
        %1027 = vmatpush1.bf16.msra.mxu0 %v764
        %1028 = vmatprep.subr.bf16.mxu0 %v771
        %1029 = vmatpush1.bf16.msra.mxu0 %v770
        %1030 = vmatprep.subr.bf16.mxu0 %v777
        %1031 = vmatpush1.bf16.msra.mxu0 %v776
        %1032 = vmatprep.subr.bf16.mxu0 %v783
        %1033 = vmatpush1.bf16.msra.mxu0 %v782
        %1034 = vmatprep.subr.bf16.mxu0 %v789
        %1035 = vmatpush1.bf16.msra.mxu0 %v788
        %1036 = vmatprep.subr.bf16.mxu0 %v795
        %1037 = vmatpush1.bf16.msra.mxu0 %v794
        %1038 = vmatprep.subr.bf16.mxu0 %v801
        %1039 = vmatpush1.bf16.msra.mxu0 %v800
        %1040 = vmatprep.subr.bf16.mxu0 %v807
        %1041 = vmatpush1.bf16.msra.mxu0 %v806
        %1042 = vmatprep.subr.bf16.mxu0 %v813
        %1043 = vmatpush1.bf16.msra.mxu0 %v812
        %1044 = vmatprep.subr.bf16.mxu0 %v819
        %1045 = vmatpush1.bf16.msra.mxu0 %v818
        %1046 = vmatprep.subr.bf16.mxu0 %v825
        %1047 = vmatpush1.bf16.msra.mxu0 %v824
        %1048 = vmatprep.subr.bf16.mxu0 %v831
        %1049 = vmatpush1.bf16.msra.mxu0 %v830
        %1050 = vmatprep.subr.bf16.mxu0 %v837
        %1051 = vmatpush1.bf16.msra.mxu0 %v836
        %1052 = vmatprep.mubr.bf16.mxu0 %v451
        %1053 = vmatmul.mubr.bf16.gmra.mrb[0].mxu0 %v450
        %v1054 = vpop.f32.mrb[0].mxu0
        %v1055 = vadd.f32 %v433, %v1054
        %v1056 = vpop.f32.mrb[0].mxu0
        %v1057 = vadd.f32 %v437, %v1056
        %v1058 = vpop.f32.mrb[0].mxu0
        %v1059 = vadd.f32 %v433, %v1058
        %v1060 = vpop.f32.mrb[0].mxu0
        %v1061 = vadd.f32 %v437, %v1060
        %1062 = vdwg.mxu0
        %v1063 = vpack.c.bf16 %v973, %v969
        %v1064 = vpack.c.bf16 %v975, %v971
        %v1065 = vpack.c.bf16 %v1016, %v1012
        %v1066 = vpack.c.bf16 %v1018, %v1014
        %v1067 = vpack.c.bf16 %v1059, %v1055
        %v1068 = vpack.c.bf16 %v1061, %v1057
        %v1069 = vld [vmem:[%s312] sm:$0x1]
        %v1070 = vld [vmem:[#allocation7] sm:$0xff]
        %v1071 = vld [vmem:[#allocation7 + $0x8] sm:$0xff]
        %v1072 = vld [vmem:[#allocation7 + $0x10] sm:$0xff]
        %v1073 = vld [vmem:[#allocation7 + $0x18] sm:$0xff]
        %v1074 = vld [vmem:[#allocation7 + $0x20] sm:$0xff]
        %v1075 = vld [vmem:[#allocation7 + $0x28] sm:$0xff]
        %v1076 = vld [vmem:[#allocation7 + $0x30] sm:$0xff]
        %v1077 = vld [vmem:[#allocation7 + $0x38] sm:$0xff]
        %v1078 = vld [vmem:[#allocation7 + $0x40] sm:$0xff]
        %v1079 = vld [vmem:[#allocation7 + $0x48] sm:$0xff]
        %v1080 = vld [vmem:[#allocation7 + $0x50] sm:$0xff]
        %v1081 = vld [vmem:[#allocation7 + $0x58] sm:$0xff]
        %v1082 = vld [vmem:[#allocation7 + $0x60] sm:$0xff]
        %v1083 = vld [vmem:[#allocation7 + $0x68] sm:$0xff]
        %v1084 = vld [vmem:[#allocation7 + $0x70] sm:$0xff]
        %v1085 = vld [vmem:[#allocation7 + $0x78] sm:$0xff]
        %v1086 = vld [vmem:[#allocation7 + $0x80] sm:$0xff]
        %v1087 = vld [vmem:[#allocation7 + $0x88] sm:$0xff]
        %v1088 = vld [vmem:[#allocation7 + $0x90] sm:$0xff]
        %v1089 = vld [vmem:[#allocation7 + $0x98] sm:$0xff]
        %v1090 = vld [vmem:[#allocation7 + $0xa0] sm:$0xff]
        %v1091 = vld [vmem:[#allocation7 + $0xa8] sm:$0xff]
        %v1092 = vld [vmem:[#allocation7 + $0xb0] sm:$0xff]
        %v1093 = vld [vmem:[#allocation7 + $0xb8] sm:$0xff]
        %v1094 = vld [vmem:[#allocation7 + $0xc0] sm:$0xff]
        %v1095 = vld [vmem:[#allocation7 + $0xc8] sm:$0xff]
        %v1096 = vld [vmem:[#allocation7 + $0xd0] sm:$0xff]
        %v1097 = vld [vmem:[#allocation7 + $0xd8] sm:$0xff]
        %v1098 = vld [vmem:[#allocation7 + $0xe0] sm:$0xff]
        %v1099 = vld [vmem:[#allocation7 + $0xe8] sm:$0xff]
        %v1100 = vld [vmem:[#allocation7 + $0xf0] sm:$0xff]
        %v1101 = vld [vmem:[#allocation7 + $0xf8] sm:$0xff]
        %v1103 = vlaneseq
        %v1104 = vshrl.u32 %v1103, 7
        %v1105 = vsub.s32 0, %v1104
        %v1106 = vrot.slane %v1069, %v1105
        %1108 = vmatprep.subr.bf16.mxu0 0
        %1109 = vmatpush1.bf16.xpose.msra.mxu0 %v1065
        %1110 = vmatprep.subr.bf16.mxu0 0
        %1111 = vmatpush1.bf16.xpose.msra.mxu0 0
        %1112 = vmatprep.subr.bf16.mxu0 0
        %1113 = vmatpush1.bf16.xpose.msra.mxu0 0
        %1114 = vmatprep.subr.bf16.mxu0 0
        %1115 = vmatpush1.bf16.xpose.msra.mxu0 0
        %1116 = vmatprep.subr.bf16.mxu0 0
        %1117 = vmatpush1.bf16.xpose.msra.mxu0 0
        %1118 = vmatprep.subr.bf16.mxu0 0
        %1119 = vmatpush1.bf16.xpose.msra.mxu0 0
        %1120 = vmatprep.subr.bf16.mxu0 0
        %1121 = vmatpush1.bf16.xpose.msra.mxu0 0
        %1122 = vmatprep.subr.bf16.mxu0 0
        %1123 = vmatpush1.bf16.xpose.msra.mxu0 0
        %1124 = vmatprep.subr.bf16.mxu0 0
        %1125 = vmatpush1.bf16.xpose.msra.mxu0 0
        %1126 = vmatprep.subr.bf16.mxu0 0
        %1127 = vmatpush1.bf16.xpose.msra.mxu0 0
        %1128 = vmatprep.subr.bf16.mxu0 0
        %1129 = vmatpush1.bf16.xpose.msra.mxu0 0
        %1130 = vmatprep.subr.bf16.mxu0 0
        %1131 = vmatpush1.bf16.xpose.msra.mxu0 0
        %1132 = vmatprep.subr.bf16.mxu0 0
        %1133 = vmatpush1.bf16.xpose.msra.mxu0 0
        %1134 = vmatprep.subr.bf16.mxu0 0
        %1135 = vmatpush1.bf16.xpose.msra.mxu0 0
        %1136 = vmatprep.subr.bf16.mxu0 0
        %1137 = vmatpush1.bf16.xpose.msra.mxu0 0
        %1138 = vmatprep.subr.bf16.mxu0 0
        %1139 = vmatpush1.bf16.xpose.msra.mxu0 0
        %1140 = vmatprep.mubr.bf16.mxu0 0
        %1141 = vmatmul.mubr.bf16.gmra.mrb[0].mxu0 %v1063
        %v1142 = vpop.f32.mrb[0].mxu0
        %v1143 = vadd.f32 %v1106, %v1142
        %v1144 = vpop.f32.mrb[0].mxu0
        %v1145 = vpop.f32.mrb[0].mxu0
        %v1146 = vadd.f32 %v1106, %v1145
        %v1147 = vpop.f32.mrb[0].mxu0
        %1148 = vdwg.mxu0
        %vm1149 = vcmask 130048
        %v1150 = vsel %vm1149, %v1143, -inf
        %1151 = vmax.xlane.f32.xlu0 %v1150
        %v1152 = vpop.xlane.xlu0 %1151
        %v1153 = vsel %vm1149, %v1146, -inf
        %1154 = vmax.xlane.f32.xlu0 %v1153
        %v1155 = vpop.xlane.xlu0 %1154
        %v1156 = vsub.f32 %v1143, %v1152
        %v1157 = vsub.f32 %v1146, %v1155
        %v1158 = vmul.f32 %v1156, 1.442695
        %v1159 = vpow.pop %v1158
        %v1160 = vmul.f32 %v1157, 1.442695
        %v1161 = vpow.pop %v1160
        %v1162 = vsel %vm1149, %v1159, 0.0
        %1163 = vadd.xlane.f32.xlu0 %v1162
        %v1164 = vpop.xlane.xlu0 %1163
        %v1165 = vsel %vm1149, %v1161, 0.0
        %1166 = vadd.xlane.f32.xlu0 %v1165
        %v1167 = vpop.xlane.xlu0 %1166
        %v1168 = vrcp.pop %v1164
        %v1169 = vrcp.pop %v1167
        %v1170 = vmul.f32 %v1159, %v1168
        %v1171 = vmul.f32 %v1161, %v1169
        %v1172 = vpack.c.bf16 %v1171, %v1170
        %v1174 = vsel %vm1149, %v1172, 0
        %1176 = vmatprep.subr.bf16.mxu0 0
        %1177 = vmatpush1.bf16.msra.mxu0 %v1067
        %1178 = vmatprep.subr.bf16.mxu0 0
        %1179 = vmatpush1.bf16.msra.mxu0 0
        %1180 = vmatprep.subr.bf16.mxu0 0
        %1181 = vmatpush1.bf16.msra.mxu0 0
        %1182 = vmatprep.subr.bf16.mxu0 0
        %1183 = vmatpush1.bf16.msra.mxu0 0
        %1184 = vmatprep.subr.bf16.mxu0 0
        %1185 = vmatpush1.bf16.msra.mxu0 0
        %1186 = vmatprep.subr.bf16.mxu0 0
        %1187 = vmatpush1.bf16.msra.mxu0 0
        %1188 = vmatprep.subr.bf16.mxu0 0
        %1189 = vmatpush1.bf16.msra.mxu0 0
        %1190 = vmatprep.subr.bf16.mxu0 0
        %1191 = vmatpush1.bf16.msra.mxu0 0
        %1192 = vmatprep.subr.bf16.mxu0 0
        %1193 = vmatpush1.bf16.msra.mxu0 0
        %1194 = vmatprep.subr.bf16.mxu0 0
        %1195 = vmatpush1.bf16.msra.mxu0 0
        %1196 = vmatprep.subr.bf16.mxu0 0
        %1197 = vmatpush1.bf16.msra.mxu0 0
        %1198 = vmatprep.subr.bf16.mxu0 0
        %1199 = vmatpush1.bf16.msra.mxu0 0
        %1200 = vmatprep.subr.bf16.mxu0 0
        %1201 = vmatpush1.bf16.msra.mxu0 0
        %1202 = vmatprep.subr.bf16.mxu0 0
        %1203 = vmatpush1.bf16.msra.mxu0 0
        %1204 = vmatprep.subr.bf16.mxu0 0
        %1205 = vmatpush1.bf16.msra.mxu0 0
        %1206 = vmatprep.subr.bf16.mxu0 0
        %1207 = vmatpush1.bf16.msra.mxu0 0
        %1208 = vmatprep.mubr.bf16.mxu0 0
        %1209 = vmatmul.mubr.bf16.gmra.mrb[0].mxu0 %v1174
        %v1210 = vpop.f32.mrb[0].mxu0
        %v1211 = vadd.f32 0.0, %v1210
        %v1212 = vpop.f32.mrb[0].mxu0
        %v1213 = vpop.f32.mrb[0].mxu0
        %v1214 = vadd.f32 0.0, %v1213
        %v1215 = vpop.f32.mrb[0].mxu0
        %1216 = vdwg.mxu0
        %v1217 = vpack.c.bf16 %v1214, %v1211
        %1218 = vmatprep.subr.bf16.mxu0 0
        %1219 = vmatpush1.bf16.xpose.msra.mxu0 %v1066
        %1220 = vmatprep.subr.bf16.mxu0 0
        %1221 = vmatpush1.bf16.xpose.msra.mxu0 0
        %1222 = vmatprep.subr.bf16.mxu0 0
        %1223 = vmatpush1.bf16.xpose.msra.mxu0 0
        %1224 = vmatprep.subr.bf16.mxu0 0
        %1225 = vmatpush1.bf16.xpose.msra.mxu0 0
        %1226 = vmatprep.subr.bf16.mxu0 0
        %1227 = vmatpush1.bf16.xpose.msra.mxu0 0
        %1228 = vmatprep.subr.bf16.mxu0 0
        %1229 = vmatpush1.bf16.xpose.msra.mxu0 0
        %1230 = vmatprep.subr.bf16.mxu0 0
        %1231 = vmatpush1.bf16.xpose.msra.mxu0 0
        %1232 = vmatprep.subr.bf16.mxu0 0
        %1233 = vmatpush1.bf16.xpose.msra.mxu0 0
        %1234 = vmatprep.subr.bf16.mxu0 0
        %1235 = vmatpush1.bf16.xpose.msra.mxu0 0
        %1236 = vmatprep.subr.bf16.mxu0 0
        %1237 = vmatpush1.bf16.xpose.msra.mxu0 0
        %1238 = vmatprep.subr.bf16.mxu0 0
        %1239 = vmatpush1.bf16.xpose.msra.mxu0 0
        %1240 = vmatprep.subr.bf16.mxu0 0
        %1241 = vmatpush1.bf16.xpose.msra.mxu0 0
        %1242 = vmatprep.subr.bf16.mxu0 0
        %1243 = vmatpush1.bf16.xpose.msra.mxu0 0
        %1244 = vmatprep.subr.bf16.mxu0 0
        %1245 = vmatpush1.bf16.xpose.msra.mxu0 0
        %1246 = vmatprep.subr.bf16.mxu0 0
        %1247 = vmatpush1.bf16.xpose.msra.mxu0 0
        %1248 = vmatprep.subr.bf16.mxu0 0
        %1249 = vmatpush1.bf16.xpose.msra.mxu0 0
        %1250 = vmatprep.mubr.bf16.mxu0 0
        %1251 = vmatmul.mubr.bf16.gmra.mrb[0].mxu0 %v1064
        %v1252 = vpop.f32.mrb[0].mxu0
        %v1253 = vadd.f32 %v1106, %v1252
        %v1254 = vpop.f32.mrb[0].mxu0
        %v1255 = vpop.f32.mrb[0].mxu0
        %v1256 = vadd.f32 %v1106, %v1255
        %v1257 = vpop.f32.mrb[0].mxu0
        %1258 = vdwg.mxu0
        %v1259 = vsel %vm1149, %v1253, -inf
        %1260 = vmax.xlane.f32.xlu0 %v1259
        %v1261 = vpop.xlane.xlu0 %1260
        %v1262 = vsel %vm1149, %v1256, -inf
        %1263 = vmax.xlane.f32.xlu0 %v1262
        %v1264 = vpop.xlane.xlu0 %1263
        %v1265 = vsub.f32 %v1253, %v1261
        %v1266 = vsub.f32 %v1256, %v1264
        %v1267 = vmul.f32 %v1265, 1.442695
        %v1268 = vpow.pop %v1267
        %v1269 = vmul.f32 %v1266, 1.442695
        %v1270 = vpow.pop %v1269
        %v1271 = vsel %vm1149, %v1268, 0.0
        %1272 = vadd.xlane.f32.xlu0 %v1271
        %v1273 = vpop.xlane.xlu0 %1272
        %v1274 = vsel %vm1149, %v1270, 0.0
        %1275 = vadd.xlane.f32.xlu0 %v1274
        %v1276 = vpop.xlane.xlu0 %1275
        %v1277 = vrcp.pop %v1273
        %v1278 = vrcp.pop %v1276
        %v1279 = vmul.f32 %v1268, %v1277
        %v1280 = vmul.f32 %v1270, %v1278
        %v1281 = vpack.c.bf16 %v1280, %v1279
        %v1283 = vsel %vm1149, %v1281, 0
        %1285 = vmatprep.subr.bf16.mxu0 0
        %1286 = vmatpush1.bf16.msra.mxu0 %v1068
        %1287 = vmatprep.subr.bf16.mxu0 0
        %1288 = vmatpush1.bf16.msra.mxu0 0
        %1289 = vmatprep.subr.bf16.mxu0 0
        %1290 = vmatpush1.bf16.msra.mxu0 0
        %1291 = vmatprep.subr.bf16.mxu0 0
        %1292 = vmatpush1.bf16.msra.mxu0 0
        %1293 = vmatprep.subr.bf16.mxu0 0
        %1294 = vmatpush1.bf16.msra.mxu0 0
        %1295 = vmatprep.subr.bf16.mxu0 0
        %1296 = vmatpush1.bf16.msra.mxu0 0
        %1297 = vmatprep.subr.bf16.mxu0 0
        %1298 = vmatpush1.bf16.msra.mxu0 0
        %1299 = vmatprep.subr.bf16.mxu0 0
        %1300 = vmatpush1.bf16.msra.mxu0 0
        %1301 = vmatprep.subr.bf16.mxu0 0
        %1302 = vmatpush1.bf16.msra.mxu0 0
        %1303 = vmatprep.subr.bf16.mxu0 0
        %1304 = vmatpush1.bf16.msra.mxu0 0
        %1305 = vmatprep.subr.bf16.mxu0 0
        %1306 = vmatpush1.bf16.msra.mxu0 0
        %1307 = vmatprep.subr.bf16.mxu0 0
        %1308 = vmatpush1.bf16.msra.mxu0 0
        %1309 = vmatprep.subr.bf16.mxu0 0
        %1310 = vmatpush1.bf16.msra.mxu0 0
        %1311 = vmatprep.subr.bf16.mxu0 0
        %1312 = vmatpush1.bf16.msra.mxu0 0
        %1313 = vmatprep.subr.bf16.mxu0 0
        %1314 = vmatpush1.bf16.msra.mxu0 0
        %1315 = vmatprep.subr.bf16.mxu0 0
        %1316 = vmatpush1.bf16.msra.mxu0 0
        %1317 = vmatprep.mubr.bf16.mxu0 0
        %1318 = vmatmul.mubr.bf16.gmra.mrb[0].mxu0 %v1283
        %v1319 = vpop.f32.mrb[0].mxu0
        %v1320 = vadd.f32 0.0, %v1319
        %v1321 = vpop.f32.mrb[0].mxu0
        %v1322 = vpop.f32.mrb[0].mxu0
        %v1323 = vadd.f32 0.0, %v1322
        %v1324 = vpop.f32.mrb[0].mxu0
        %1325 = vdwg.mxu0
        %v1326 = vpack.c.bf16 %v1323, %v1320
        %v1343 = vunpack.c.l.b16 %v1086
        %v1344 = vunpack.c.h.b16 %v1086
        %v1345 = vunpack.c.l.b16 %v1087
        %v1346 = vunpack.c.h.b16 %v1087
        %v1347 = vunpack.c.l.b16 %v1088
        %v1348 = vunpack.c.h.b16 %v1088
        %v1349 = vunpack.c.l.b16 %v1089
        %v1350 = vunpack.c.h.b16 %v1089
        %v1351 = vunpack.c.l.b16 %v1090
        %v1352 = vunpack.c.h.b16 %v1090
        %v1353 = vunpack.c.l.b16 %v1091
        %v1354 = vunpack.c.h.b16 %v1091
        %v1355 = vunpack.c.l.b16 %v1092
        %v1356 = vunpack.c.h.b16 %v1092
        %v1357 = vunpack.c.l.b16 %v1093
        %v1358 = vunpack.c.h.b16 %v1093
        %v1359 = vunpack.c.l.b16 %v1094
        %v1360 = vunpack.c.h.b16 %v1094
        %v1361 = vunpack.c.l.b16 %v1095
        %v1362 = vunpack.c.h.b16 %v1095
        %v1363 = vunpack.c.l.b16 %v1096
        %v1364 = vunpack.c.h.b16 %v1096
        %v1365 = vunpack.c.l.b16 %v1097
        %v1366 = vunpack.c.h.b16 %v1097
        %v1367 = vunpack.c.l.b16 %v1098
        %v1368 = vunpack.c.h.b16 %v1098
        %v1369 = vunpack.c.l.b16 %v1099
        %v1370 = vunpack.c.h.b16 %v1099
        %v1371 = vunpack.c.l.b16 %v1100
        %v1372 = vunpack.c.h.b16 %v1100
        %v1373 = vunpack.c.l.b16 %v1101
        %v1374 = vunpack.c.h.b16 %v1101
        %v1375 = vpack.c.b16 %v1345, %v1343
        %v1376 = vpack.c.b16 %v1346, %v1344
        %v1377 = vpack.c.b16 %v1349, %v1347
        %v1378 = vpack.c.b16 %v1350, %v1348
        %v1379 = vpack.c.b16 %v1353, %v1351
        %v1380 = vpack.c.b16 %v1354, %v1352
        %v1381 = vpack.c.b16 %v1357, %v1355
        %v1382 = vpack.c.b16 %v1358, %v1356
        %v1383 = vpack.c.b16 %v1361, %v1359
        %v1384 = vpack.c.b16 %v1362, %v1360
        %v1385 = vpack.c.b16 %v1365, %v1363
        %v1386 = vpack.c.b16 %v1366, %v1364
        %v1387 = vpack.c.b16 %v1369, %v1367
        %v1388 = vpack.c.b16 %v1370, %v1368
        %v1389 = vpack.c.b16 %v1373, %v1371
        %v1390 = vpack.c.b16 %v1374, %v1372
        %1407 = vmatprep.subr.bf16.mxu0 %v1376
        %1408 = vmatpush1.bf16.msra.mxu0 %v1375
        %1409 = vmatprep.subr.bf16.mxu0 %v1378
        %1410 = vmatpush1.bf16.msra.mxu0 %v1377
        %1411 = vmatprep.subr.bf16.mxu0 %v1380
        %1412 = vmatpush1.bf16.msra.mxu0 %v1379
        %1413 = vmatprep.subr.bf16.mxu0 %v1382
        %1414 = vmatpush1.bf16.msra.mxu0 %v1381
        %1415 = vmatprep.subr.bf16.mxu0 %v1384
        %1416 = vmatpush1.bf16.msra.mxu0 %v1383
        %1417 = vmatprep.subr.bf16.mxu0 %v1386
        %1418 = vmatpush1.bf16.msra.mxu0 %v1385
        %1419 = vmatprep.subr.bf16.mxu0 %v1388
        %1420 = vmatpush1.bf16.msra.mxu0 %v1387
        %1421 = vmatprep.subr.bf16.mxu0 %v1390
        %1422 = vmatpush1.bf16.msra.mxu0 %v1389
        %1423 = vmatprep.subr.bf16.mxu0 0
        %1424 = vmatpush1.bf16.msra.mxu0 0
        %1425 = vmatprep.subr.bf16.mxu0 0
        %1426 = vmatpush1.bf16.msra.mxu0 0
        %1427 = vmatprep.subr.bf16.mxu0 0
        %1428 = vmatpush1.bf16.msra.mxu0 0
        %1429 = vmatprep.subr.bf16.mxu0 0
        %1430 = vmatpush1.bf16.msra.mxu0 0
        %1431 = vmatprep.subr.bf16.mxu0 0
        %1432 = vmatpush1.bf16.msra.mxu0 0
        %1433 = vmatprep.subr.bf16.mxu0 0
        %1434 = vmatpush1.bf16.msra.mxu0 0
        %1435 = vmatprep.subr.bf16.mxu0 0
        %1436 = vmatpush1.bf16.msra.mxu0 0
        %1437 = vmatprep.subr.bf16.mxu0 0
        %1438 = vmatpush1.bf16.msra.mxu0 0
        %1439 = vmatprep.mubr.bf16.mxu0 0
        %1440 = vmatmul.mubr.bf16.gmra.mrb[0].mxu0 %v1326
        %v1441 = vpop.f32.mrb[0].mxu0
        %v1442 = vadd.f32 0.0, %v1441
        %v1443 = vpop.f32.mrb[0].mxu0
        %v1444 = vadd.f32 0.0, %v1443
        %v1445 = vpop.f32.mrb[0].mxu0
        %v1446 = vadd.f32 0.0, %v1445
        %v1447 = vpop.f32.mrb[0].mxu0
        %v1448 = vadd.f32 0.0, %v1447
        %1449 = vdwg.mxu0
        %v1466 = vunpack.c.l.b16 %v1070
        %v1467 = vunpack.c.h.b16 %v1070
        %v1468 = vunpack.c.l.b16 %v1071
        %v1469 = vunpack.c.h.b16 %v1071
        %v1470 = vunpack.c.l.b16 %v1072
        %v1471 = vunpack.c.h.b16 %v1072
        %v1472 = vunpack.c.l.b16 %v1073
        %v1473 = vunpack.c.h.b16 %v1073
        %v1474 = vunpack.c.l.b16 %v1074
        %v1475 = vunpack.c.h.b16 %v1074
        %v1476 = vunpack.c.l.b16 %v1075
        %v1477 = vunpack.c.h.b16 %v1075
        %v1478 = vunpack.c.l.b16 %v1076
        %v1479 = vunpack.c.h.b16 %v1076
        %v1480 = vunpack.c.l.b16 %v1077
        %v1481 = vunpack.c.h.b16 %v1077
        %v1482 = vunpack.c.l.b16 %v1078
        %v1483 = vunpack.c.h.b16 %v1078
        %v1484 = vunpack.c.l.b16 %v1079
        %v1485 = vunpack.c.h.b16 %v1079
        %v1486 = vunpack.c.l.b16 %v1080
        %v1487 = vunpack.c.h.b16 %v1080
        %v1488 = vunpack.c.l.b16 %v1081
        %v1489 = vunpack.c.h.b16 %v1081
        %v1490 = vunpack.c.l.b16 %v1082
        %v1491 = vunpack.c.h.b16 %v1082
        %v1492 = vunpack.c.l.b16 %v1083
        %v1493 = vunpack.c.h.b16 %v1083
        %v1494 = vunpack.c.l.b16 %v1084
        %v1495 = vunpack.c.h.b16 %v1084
        %v1496 = vunpack.c.l.b16 %v1085
        %v1497 = vunpack.c.h.b16 %v1085
        %v1498 = vpack.c.b16 %v1468, %v1466
        %v1499 = vpack.c.b16 %v1469, %v1467
        %v1500 = vpack.c.b16 %v1472, %v1470
        %v1501 = vpack.c.b16 %v1473, %v1471
        %v1502 = vpack.c.b16 %v1476, %v1474
        %v1503 = vpack.c.b16 %v1477, %v1475
        %v1504 = vpack.c.b16 %v1480, %v1478
        %v1505 = vpack.c.b16 %v1481, %v1479
        %v1506 = vpack.c.b16 %v1484, %v1482
        %v1507 = vpack.c.b16 %v1485, %v1483
        %v1508 = vpack.c.b16 %v1488, %v1486
        %v1509 = vpack.c.b16 %v1489, %v1487
        %v1510 = vpack.c.b16 %v1492, %v1490
        %v1511 = vpack.c.b16 %v1493, %v1491
        %v1512 = vpack.c.b16 %v1496, %v1494
        %v1513 = vpack.c.b16 %v1497, %v1495
        %1530 = vmatprep.subr.bf16.mxu0 %v1499
        %1531 = vmatpush1.bf16.msra.mxu0 %v1498
        %1532 = vmatprep.subr.bf16.mxu0 %v1501
        %1533 = vmatpush1.bf16.msra.mxu0 %v1500
        %1534 = vmatprep.subr.bf16.mxu0 %v1503
        %1535 = vmatpush1.bf16.msra.mxu0 %v1502
        %1536 = vmatprep.subr.bf16.mxu0 %v1505
        %1537 = vmatpush1.bf16.msra.mxu0 %v1504
        %1538 = vmatprep.subr.bf16.mxu0 %v1507
        %1539 = vmatpush1.bf16.msra.mxu0 %v1506
        %1540 = vmatprep.subr.bf16.mxu0 %v1509
        %1541 = vmatpush1.bf16.msra.mxu0 %v1508
        %1542 = vmatprep.subr.bf16.mxu0 %v1511
        %1543 = vmatpush1.bf16.msra.mxu0 %v1510
        %1544 = vmatprep.subr.bf16.mxu0 %v1513
        %1545 = vmatpush1.bf16.msra.mxu0 %v1512
        %1546 = vmatprep.subr.bf16.mxu0 0
        %1547 = vmatpush1.bf16.msra.mxu0 0
        %1548 = vmatprep.subr.bf16.mxu0 0
        %1549 = vmatpush1.bf16.msra.mxu0 0
        %1550 = vmatprep.subr.bf16.mxu0 0
        %1551 = vmatpush1.bf16.msra.mxu0 0
        %1552 = vmatprep.subr.bf16.mxu0 0
        %1553 = vmatpush1.bf16.msra.mxu0 0
        %1554 = vmatprep.subr.bf16.mxu0 0
        %1555 = vmatpush1.bf16.msra.mxu0 0
        %1556 = vmatprep.subr.bf16.mxu0 0
        %1557 = vmatpush1.bf16.msra.mxu0 0
        %1558 = vmatprep.subr.bf16.mxu0 0
        %1559 = vmatpush1.bf16.msra.mxu0 0
        %1560 = vmatprep.subr.bf16.mxu0 0
        %1561 = vmatpush1.bf16.msra.mxu0 0
        %1562 = vmatprep.mubr.bf16.mxu0 0
        %1563 = vmatmul.mubr.bf16.gmra.mrb[0].mxu0 %v1217
        %v1564 = vpop.f32.mrb[0].mxu0
        %v1565 = vadd.f32 %v1442, %v1564
        %v1566 = vpop.f32.mrb[0].mxu0
        %v1567 = vadd.f32 %v1444, %v1566
        %v1568 = vpop.f32.mrb[0].mxu0
        %v1569 = vadd.f32 %v1446, %v1568
        %v1570 = vpop.f32.mrb[0].mxu0
        %v1571 = vadd.f32 %v1448, %v1570
        %1572 = vdwg.mxu0
        %v1573 = vld [vmem:[%s4] sm:$0x3]
        %v1575 = vlaneseq
        %v1576 = vshrl.u32 %v1575, 7
        %v1577 = vsub.s32 0, %v1576
        %v1578 = vrot.slane %v1573, %v1577
        %v1579 = vlaneseq
        %v1580 = vshrl.u32 %v1579, 7
        %v1581 = vsub.s32 1, %v1580
        %v1582 = vrot.slane %v1573, %v1581
        %v1585 = vadd.f32 %v1565, %v1578
        %v1586 = vadd.f32 %v1567, %v1582
        %v1587 = vadd.f32 %v1569, %v1578
        %v1588 = vadd.f32 %v1571, %v1582
        %1589 = vst [vmem:[%s309] sm:$0xff] %v1585
        %1590 = vst [vmem:[%s309 + $0x8] sm:$0xff] %v1586
        %1591 = vst [vmem:[%s309 + $0x10] sm:$0xff] %v1587
        %1592 = vst [vmem:[%s309 + $0x18] sm:$0xff] %v1588
        %s1593 = sand.u32 %s168, 1
        %s1594 = scalar_lea.sflag [#allocation4], %s1593
        %s1595 = sand.u32 %s168, 1
        %s1596 = smul.addr %s1595, 32
        %s1597 = scalar_lea.vmem [#allocation8], %s1596
        // Predicated region
        $region57: #{tpu_custom_call.1} parent=43 // pred_check
          %p1598 = pneg %p178
        $region58: #{tpu_custom_call.1} parent=43 // pred_check_branch
          %1600 = sbr.rel (%p1598) target = $region60
        $region59: #{tpu_custom_call.1} parent=43 // pred_region
          %s1602 = ssub.s32 512, 512
          %1603 = vsyncadd %s1594, %s1602
          %s1604 = smul.addr %s24, 4
          %s1605 = smul.addr %s1604, 128
          %s1606 = scalar_lea.hbm %s6, %s1605
          %s1607 = sshll.u32 %s1597, 4
          %s1608 = int_to_ptr.vmem [resolvable:$true] %s1607
          %1613 = dma.vmem_to_hbm [thread:$0]  %s1608, 512, %s1606, %s1594, 256, 256, 16
        $region60: #{tpu_custom_call.1} parent=43 // pred_fallthru
          _
      $region44: #{tpu_custom_call.1} parent=5 // pred_fallthru
        _
      %p1614 = scmp.le.s32.totalorder 2, %s19
      // Predicated region
      $region61: #{tpu_custom_call.1} parent=5 // pred_check
        %p1615 = pneg %p1614
      $region62: #{tpu_custom_call.1} parent=5 // pred_check_branch
        %1617 = sbr.rel (%p1615) target = $region64
      $region63: #{tpu_custom_call.1} parent=5 // pred_region
        %s1618 = ssub.s32 %s19, 2
        // Predicated region
        $region65: #{tpu_custom_call.1} parent=63 // pred_check
          %p1619 = pneg %p184
        $region66: #{tpu_custom_call.1} parent=63 // pred_check_branch
          %1621 = sbr.rel (%p1619) target = $region68
        $region67: #{tpu_custom_call.1} parent=63 // pred_region
          %s1622 = sand.u32 %s169, 1
          %s1623 = scalar_lea.sflag [#allocation4], %s1622
          %s1624 = sand.u32 %s169, 1
          %s1625 = smul.addr %s1624, 32
          %s1626 = scalar_lea.vmem [#allocation8], %s1625
          %1627 = dma.done %s1623, 512
        $region68: #{tpu_custom_call.1} parent=63 // pred_fallthru
          _
      $region64: #{tpu_custom_call.1} parent=5 // pred_fallthru
        _
    $region6: #{tpu_custom_call.1} parent=1 // loop_footer
      %s23 = sadd.s32 1, %s19
    $region7: #{tpu_custom_call.1} parent=1 // loop_footer_branch
      %18 = sbr.rel target = $region3
    $region8: #{tpu_custom_call.1} parent=1 // loop_exit
      _
    %1628 = vsyncpa [#allocation3], 1
    %s1629 = scalar_lea.sflag [#allocation3], 1
    %1630 = vsyncpa %s1629, 1
    %1631 = vsyncpa [#allocation6], 1
    %1632 = vsyncpa [#allocation4], 1
    %s1633 = scalar_lea.sflag [#allocation4], 1
    %1634 = vsyncpa %s1633, 1

</llo_original>
